<compile_context>
chip_gen: v5e
topology: v5e:2x2
jax: 0.10.0
libtpu: 0.0.40
codegen_flags: <defaults>
</compile_context>

<pallas_src>
import math
import functools

import jax
import jax.numpy as jnp
from jax.experimental import pallas as pl
from jax.experimental.pallas import tpu as pltpu


# ---------------------------------------------------------------------------
# helpers
# ---------------------------------------------------------------------------

def _round_up(x, m):
    return ((x + m - 1) // m) * m


def _seq_tile(length, target):
    # Tile must be a multiple of 8 (sublane rule) or cover the padded extent.
    if length <= target:
        return _round_up(length, 8)
    return target


def _compiler_params():
    # Generation-aware scoped-VMEM limit: ~3/4 of physical per-core VMEM,
    # capped at 112 MiB (v5e/v6e -> 96 MiB, v7x -> 48 MiB).  Falls back to the
    # compiler default if the hardware query is unavailable.
    vmem_limit = None
    try:
        cap = int(pltpu.get_tpu_info().vmem_capacity_bytes)
        vmem_limit = min((cap * 3) // 4, 112 * 1024 * 1024)
    except Exception:
        pass
    return pltpu.CompilerParams(
        # batch and q-tile axes are independent (megacore-shardable on the
        # leading axis); the kv axis carries the online-softmax accumulator.
        dimension_semantics=("parallel", "parallel", "arbitrary"),
        vmem_limit_bytes=vmem_limit,
    )


# ---------------------------------------------------------------------------
# Pallas flash multi-head attention kernel
# ---------------------------------------------------------------------------

def _flash_mha_kernel(q_ref, k_ref, v_ref, o_ref, m_ref, l_ref, acc_ref, *,
                      n_heads, head_dim, scale, causal, kv_len):
    """One grid step: all heads of one batch element, TQ queries x TS keys.

    q_ref: (TQ, D)   k_ref/v_ref: (TS, D)   o_ref: (TQ, D)   with D = H*E.
    m_ref/l_ref: (H, TQ, 1) f32 running max / sum; acc_ref: (TQ, D) f32.
    Grid axis 2 (kv tiles) is innermost / "arbitrary": online softmax.
    """
    s_idx = pl.program_id(2)
    TQ = q_ref.shape[0]
    TS = k_ref.shape[0]

    @pl.when(s_idx == 0)
    def _init():
        m_ref[...] = jnp.full_like(m_ref, -jnp.inf)
        l_ref[...] = jnp.zeros_like(l_ref)
        acc_ref[...] = jnp.zeros_like(acc_ref)

    q_start = pl.program_id(1) * TQ
    kv_start = s_idx * TS

    def update():
        # Masks are shared by all heads and only built when they can apply.
        keep = None
        if causal:
            q_pos = q_start + jax.lax.broadcasted_iota(jnp.int32, (TQ, TS), 0)
            k_pos = kv_start + jax.lax.broadcasted_iota(jnp.int32, (TQ, TS), 1)
            keep = k_pos <= q_pos
        if kv_len is not None:   # padded key positions (S not tile-aligned)
            k_pos = kv_start + jax.lax.broadcasted_iota(jnp.int32, (TQ, TS), 1)
            valid = k_pos < kv_len
            keep = valid if keep is None else jnp.logical_and(keep, valid)

        for h in range(n_heads):
            sl = pl.ds(h * head_dim, head_dim)
            q_h = q_ref[:, sl]                     # (TQ, E), native dtype
            k_h = k_ref[:, sl]                     # (TS, E)
            v_h = v_ref[:, sl]                     # (TS, E)

            # scores[q, s] = sum_e q[q, e] * k[s, e]  (MXU, f32 accumulation,
            # no explicit transpose).
            s_h = jax.lax.dot_general(
                q_h, k_h, (((1,), (1,)), ((), ())),
                preferred_element_type=jnp.float32)
            s_h = s_h * jnp.float32(scale)         # scale in f32 (bf16-safe)
            if keep is not None:
                s_h = jnp.where(keep, s_h, jnp.float32(-1e30))

            # Online softmax update (all in f32).
            m_prev = m_ref[h]                                          # (TQ, 1)
            m_new = jnp.maximum(m_prev, jnp.max(s_h, axis=-1, keepdims=True))
            alpha = jnp.exp(m_prev - m_new)                            # (TQ, 1)
            p = jnp.exp(s_h - m_new)                                   # (TQ, TS)
            l_ref[h] = alpha * l_ref[h] + jnp.sum(p, axis=-1, keepdims=True)
            m_ref[h] = m_new

            pv = jax.lax.dot_general(
                p.astype(v_h.dtype), v_h, (((1,), (0,)), ((), ())),
                preferred_element_type=jnp.float32)                    # (TQ, E)
            acc_ref[:, sl] = alpha * acc_ref[:, sl] + pv

    if causal:
        # Skip key tiles lying entirely in the masked future of this q tile
        # (~2x less MXU work on the self-attention path).
        pl.when(kv_start <= q_start + TQ - 1)(update)
    else:
        update()

    @pl.when(s_idx == pl.num_programs(2) - 1)
    def _finalize():
        for h in range(n_heads):
            sl = pl.ds(h * head_dim, head_dim)
            inv_l = pl.reciprocal(l_ref[h], approx=False)  # exact: rows sum to 1
            acc_ref[:, sl] = acc_ref[:, sl] * inv_l
        # Single lane-dense (TQ, H*E) store.
        o_ref[...] = acc_ref[...].astype(o_ref.dtype)


def flash_mha(q, k, v, *, n_heads, scale=None, causal=False,
              q_tile=256, kv_tile=256, out_dtype=None):
    """Fused multi-head attention.

    q: [B, Lq, D], k/v: [B, Lk, D] with D = n_heads * head_dim.
    Returns [B, Lq, D] with heads already merged (no output transpose needed).
    """
    B, Lq, D = q.shape
    Bk, Lk, Dk = k.shape
    assert (Bk, Dk) == (B, D) and v.shape == k.shape
    assert D % n_heads == 0
    E = D // n_heads
    out_dtype = out_dtype if out_dtype is not None else q.dtype
    scale = float(scale) if scale is not None else 1.0 / math.sqrt(E)

    TQ = _seq_tile(Lq, q_tile)
    TS = _seq_tile(Lk, kv_tile)
    Lq_pad = _round_up(Lq, TQ)
    Lk_pad = _round_up(Lk, TS)
    if Lq_pad != Lq:
        q = jnp.pad(q, ((0, 0), (0, Lq_pad - Lq), (0, 0)))
    if Lk_pad != Lk:
        k = jnp.pad(k, ((0, 0), (0, Lk_pad - Lk), (0, 0)))
        v = jnp.pad(v, ((0, 0), (0, Lk_pad - Lk), (0, 0)))
    kv_len = Lk if Lk_pad != Lk else None   # mask padded keys only if present

    kernel = functools.partial(
        _flash_mha_kernel, n_heads=n_heads, head_dim=E, scale=scale,
        causal=causal, kv_len=kv_len)

    out = pl.pallas_call(
        kernel,
        out_shape=jax.ShapeDtypeStruct((B, Lq_pad, D), out_dtype),
        grid_spec=pltpu.PrefetchScalarGridSpec(
            num_scalar_prefetch=0,
            grid=(B, Lq_pad // TQ, Lk_pad // TS),
            in_specs=[
                pl.BlockSpec((None, TQ, D), lambda b, t, s: (b, t, 0)),
                pl.BlockSpec((None, TS, D), lambda b, t, s: (b, s, 0)),
                pl.BlockSpec((None, TS, D), lambda b, t, s: (b, s, 0)),
            ],
            out_specs=pl.BlockSpec((None, TQ, D), lambda b, t, s: (b, t, 0)),
            scratch_shapes=[
                pltpu.VMEM((n_heads, TQ, 1), jnp.float32),   # running max
                pltpu.VMEM((n_heads, TQ, 1), jnp.float32),   # running sum
                pltpu.VMEM((TQ, D), jnp.float32),            # output accumulator
            ],
        ),
        compiler_params=_compiler_params(),
    )(q, k, v)

    return out[:, :Lq, :] if Lq_pad != Lq else out


# ---------------------------------------------------------------------------
# Pure-JAX reference attention (for correctness checks)
# ---------------------------------------------------------------------------

def _mha_reference(q, k, v, *, n_heads, causal, scale=None):
    B, Lq, D = q.shape
    Lk = k.shape[1]
    E = D // n_heads
    scale = scale if scale is not None else 1.0 / math.sqrt(E)
    qh = q.reshape(B, Lq, n_heads, E).transpose(0, 2, 1, 3)
    kh = k.reshape(B, Lk, n_heads, E).transpose(0, 2, 1, 3)
    vh = v.reshape(B, Lk, n_heads, E).transpose(0, 2, 1, 3)
    scores = jnp.einsum("bhle,bhse->bhls", qh, kh,
                        preferred_element_type=jnp.float32) * jnp.float32(scale)
    if causal:
        keep = jnp.tril(jnp.ones((Lq, Lk), dtype=bool))
        scores = jnp.where(keep, scores, jnp.float32(-1e30))
    attn = jax.nn.softmax(scores, axis=-1)
    out = jnp.einsum("bhls,bhse->bhle", attn.astype(vh.dtype), vh,
                     preferred_element_type=jnp.float32)
    return out.transpose(0, 2, 1, 3).reshape(B, Lq, D)


# ---------------------------------------------------------------------------
# Decoder composition (projections / norms / FFN are plain jnp ops)
# ---------------------------------------------------------------------------
# TODO(synk): the Linear / LayerNorm / Conv1d(kernel_size=1) glue around the
#             attention core is left as plain jnp (XLA) ops, not fused into
#             Pallas.

def _layer_norm(x, gamma, beta, eps=1e-5):
    mu = jnp.mean(x, axis=-1, keepdims=True)
    var = jnp.mean((x - mu) ** 2, axis=-1, keepdims=True)
    return (x - mu) * jax.lax.rsqrt(var + eps) * gamma + beta


def _attention_layer(p, queries, keys, values, *, n_heads, causal, use_pallas,
                     compute_dtype=jnp.bfloat16):
    q = queries @ p["wq"] + p["bq"]   # (B, Lq, d_model)
    k = keys @ p["wk"] + p["bk"]      # (B, Lk, d_model)
    v = values @ p["wv"] + p["bv"]
    if compute_dtype is not None:
        # bf16 MXU matmuls (f32 accumulation / softmax inside the kernel).
        q = q.astype(compute_dtype)
        k = k.astype(compute_dtype)
        v = v.astype(compute_dtype)
    if use_pallas:
        o = flash_mha(q, k, v, n_heads=n_heads, causal=causal,
                      out_dtype=queries.dtype)
    else:
        o = _mha_reference(q, k, v, n_heads=n_heads, causal=causal)
        o = o.astype(queries.dtype)
    return o @ p["wo"] + p["bo"]


def _decoder_layer(p, x, cross, *, n_heads, use_pallas, compute_dtype):
    # self-attention is causally masked (Informer TriangularCausalMask),
    # cross-attention is unmasked; dropout is identity (eval mode).
    x = x + _attention_layer(p["self_attn"], x, x, x, n_heads=n_heads,
                             causal=True, use_pallas=use_pallas,
                             compute_dtype=compute_dtype)
    x = _layer_norm(x, p["norm1_g"], p["norm1_b"])
    x = x + _attention_layer(p["cross_attn"], x, cross, cross, n_heads=n_heads,
                             causal=False, use_pallas=use_pallas,
                             compute_dtype=compute_dtype)
    y = x = _layer_norm(x, p["norm2_g"], p["norm2_b"])
    # Conv1d(kernel_size=1) over channels == point-wise linear.
    y = jax.nn.relu(y @ p["conv1_w"] + p["conv1_b"])
    y = y @ p["conv2_w"] + p["conv2_b"]
    return _layer_norm(x + y, p["norm3_g"], p["norm3_b"])


def decoder_forward(params, x, enc_output, *, n_heads, use_pallas=True,
                    compute_dtype=jnp.bfloat16):
    for lp in params["layers"]:
        x = _decoder_layer(lp, x, enc_output, n_heads=n_heads,
                           use_pallas=use_pallas, compute_dtype=compute_dtype)
    if params.get("norm_g") is not None:
        x = _layer_norm(x, params["norm_g"], params["norm_b"])
    return x @ params["proj_w"] + params["proj_b"]


def _init_decoder_params(key, *, num_layers, d_model, d_ff):
    def dense(k, fan_in, fan_out):
        w = jax.random.normal(k, (fan_in, fan_out), jnp.float32) / math.sqrt(fan_in)
        b = jnp.zeros((fan_out,), jnp.float32)
        return w, b

    def attn_params(k):
        ks = jax.random.split(k, 4)
        wq, bq = dense(ks[0], d_model, d_model)
        wk, bk = dense(ks[1], d_model, d_model)
        wv, bv = dense(ks[2], d_model, d_model)
        wo, bo = dense(ks[3], d_model, d_model)
        return dict(wq=wq, bq=bq, wk=wk, bk=bk, wv=wv, bv=bv, wo=wo, bo=bo)

    keys = jax.random.split(key, num_layers + 1)
    layers = []
    ones = jnp.ones((d_model,), jnp.float32)
    zeros = jnp.zeros((d_model,), jnp.float32)
    for lk in keys[:num_layers]:
        ks = jax.random.split(lk, 4)
        conv1_w, conv1_b = dense(ks[2], d_model, d_ff)
        conv2_w, conv2_b = dense(ks[3], d_ff, d_model)
        layers.append(dict(
            self_attn=attn_params(ks[0]),
            cross_attn=attn_params(ks[1]),
            conv1_w=conv1_w, conv1_b=conv1_b,
            conv2_w=conv2_w, conv2_b=conv2_b,
            norm1_g=ones, norm1_b=zeros,
            norm2_g=ones, norm2_b=zeros,
            norm3_g=ones, norm3_b=zeros,
        ))
    proj_w, proj_b = dense(keys[-1], d_model, 1)
    return dict(layers=layers, norm_g=ones, norm_b=zeros,
                proj_w=proj_w, proj_b=proj_b)


# ---------------------------------------------------------------------------
# main
# ---------------------------------------------------------------------------

if __name__ == "__main__":
    B = 2
    dec_len, enc_len = 16, 32
    d_model, n_heads, d_ff, num_layers = 32, 4, 64, 2

    key = jax.random.PRNGKey(0)
    kx, ke, kp, kq, kk, kv = jax.random.split(key, 6)

    # 1) standalone kernel checks (f32; tiny tiles exercise the online-softmax
    #    accumulator, the causal tile-skip path, and key-padding masking).
    q = jax.random.normal(kq, (B, dec_len, d_model), jnp.float32)
    k = jax.random.normal(kk, (B, dec_len, d_model), jnp.float32)
    v = jax.random.normal(kv, (B, dec_len, d_model), jnp.float32)

    out = flash_mha(q, k, v, n_heads=n_heads, causal=True, q_tile=8, kv_tile=8)
    jax.block_until_ready(out)
    ref = _mha_reference(q, k, v, n_heads=n_heads, causal=True)
    assert jnp.allclose(out, ref, atol=2e-3, rtol=2e-3), "causal attention mismatch"

    kc = jax.random.normal(kk, (B, 20, d_model), jnp.float32)
    vc = jax.random.normal(kv, (B, 20, d_model), jnp.float32)
    out_c = flash_mha(q, kc, vc, n_heads=n_heads, causal=False,
                      q_tile=16, kv_tile=8)
    jax.block_until_ready(out_c)
    ref_c = _mha_reference(q, kc, vc, n_heads=n_heads, causal=False)
    assert jnp.allclose(out_c, ref_c, atol=2e-3, rtol=2e-3), "cross attention mismatch"

    # 2) full Decoder forward: Pallas attention vs. pure-JAX reference
    #    attention (both paths use bf16 attention matmuls, f32 softmax).
    x = jax.random.normal(kx, (B, dec_len, d_model), jnp.float32)
    enc_output = jax.random.normal(ke, (B, enc_len, d_model), jnp.float32)
    params = _init_decoder_params(kp, num_layers=num_layers,
                                  d_model=d_model, d_ff=d_ff)

    y_pallas = decoder_forward(params, x, enc_output, n_heads=n_heads,
                               use_pallas=True)
    jax.block_until_ready(y_pallas)
    y_ref = decoder_forward(params, x, enc_output, n_heads=n_heads,
                            use_pallas=False)
    assert y_pallas.shape == (B, dec_len, 1)
    assert jnp.allclose(y_pallas, y_ref, atol=2e-2, rtol=2e-2), "decoder output mismatch"

    print("KERNEL_OK")
</pallas_src>

<mosaic_0001>
module attributes {stable_mosaic.version = 11 : i64} {
  func.func @_flash_mha_kernel(%arg0: i32, %arg1: i32, %arg2: i32, %arg3: memref<1x8x32xf32, #tpu.memory_space<vmem>>, %arg4: memref<1x8x32xf32, #tpu.memory_space<vmem>>, %arg5: memref<1x8x32xf32, #tpu.memory_space<vmem>>, %arg6: memref<1x8x32xf32, #tpu.memory_space<vmem>>, %arg7: memref<4x8x1xf32, #tpu.memory_space<vmem>>, %arg8: memref<4x8x1xf32, #tpu.memory_space<vmem>>, %arg9: memref<8x32xf32, #tpu.memory_space<vmem>>) attributes {dimension_semantics = [#tpu.dimension_semantics<parallel>, #tpu.dimension_semantics<parallel>, #tpu.dimension_semantics<arbitrary>], iteration_bounds = array<i64: 2, 2, 2>, scalar_prefetch = 0 : i64, scratch_operands = 3 : i64, tpu.core_type = #tpu.core_type<tc>, window_params = [{transform_indices = @transform_0, window_bounds = array<i64: 1, 8, 32>}, {transform_indices = @transform_1, window_bounds = array<i64: 1, 8, 32>}, {transform_indices = @transform_2, window_bounds = array<i64: 1, 8, 32>}, {transform_indices = @transform_3, window_bounds = array<i64: 1, 8, 32>}]} {
    %c0_i32 = arith.constant 0 : i32
    %0 = arith.cmpi eq, %arg2, %c0_i32 : i32
    %1 = arith.extui %0 : i1 to i32
    %c0_i32_0 = arith.constant 0 : i32
    %2 = arith.cmpi ne, %1, %c0_i32_0 : i32
    scf.if %2 {
      %cst = arith.constant 0xFF800000 : f32
      %13 = vector.broadcast %cst : f32 to vector<4x8x1xf32>
      %c0 = arith.constant 0 : index
      %c0_6 = arith.constant 0 : index
      %c0_7 = arith.constant 0 : index
      %14 = vector.load %arg7[%c0, %c0_6, %c0_7] : memref<4x8x1xf32, #tpu.memory_space<vmem>>, vector<4x8x1xf32>
      tpu.vector_store %arg7[%c0, %c0_6, %c0_7], %13 {strides = array<i32>} : memref<4x8x1xf32, #tpu.memory_space<vmem>>, vector<4x8x1xf32>,
      %cst_8 = arith.constant 0.000000e+00 : f32
      %15 = vector.broadcast %cst_8 : f32 to vector<4x8x1xf32>
      %c0_9 = arith.constant 0 : index
      %c0_10 = arith.constant 0 : index
      %c0_11 = arith.constant 0 : index
      %16 = vector.load %arg8[%c0_9, %c0_10, %c0_11] : memref<4x8x1xf32, #tpu.memory_space<vmem>>, vector<4x8x1xf32>
      tpu.vector_store %arg8[%c0_9, %c0_10, %c0_11], %15 {strides = array<i32>} : memref<4x8x1xf32, #tpu.memory_space<vmem>>, vector<4x8x1xf32>,
      %cst_12 = arith.constant 0.000000e+00 : f32
      %17 = vector.broadcast %cst_12 : f32 to vector<8x32xf32>
      %c0_13 = arith.constant 0 : index
      %c0_14 = arith.constant 0 : index
      %18 = vector.load %arg9[%c0_13, %c0_14] : memref<8x32xf32, #tpu.memory_space<vmem>>, vector<8x32xf32>
      tpu.vector_store %arg9[%c0_13, %c0_14], %17 {strides = array<i32>} : memref<8x32xf32, #tpu.memory_space<vmem>>, vector<8x32xf32>,
    } else {
    }
    %c8_i32 = arith.constant 8 : i32
    %3 = arith.muli %arg1, %c8_i32 : i32
    %c8_i32_1 = arith.constant 8 : i32
    %4 = arith.muli %arg2, %c8_i32_1 : i32
    %c8_i32_2 = arith.constant 8 : i32
    %5 = arith.addi %3, %c8_i32_2 : i32
    %c1_i32 = arith.constant 1 : i32
    %6 = arith.subi %5, %c1_i32 : i32
    %7 = arith.cmpi sle, %4, %6 : i32
    %8 = arith.extui %7 : i1 to i32
    %c0_i32_3 = arith.constant 0 : i32
    %9 = arith.cmpi ne, %8, %c0_i32_3 : i32
    scf.if %9 {
      %13 = tpu.iota {dimensions = array<i32: 0>} : vector<8x8xi32>
      %14 = vector.broadcast %3 : i32 to vector<8x8xi32>
      %15 = arith.addi %14, %13 : vector<8x8xi32>
      %16 = tpu.iota {dimensions = array<i32: 1>} : vector<8x8xi32>
      %17 = vector.broadcast %4 : i32 to vector<8x8xi32>
      %18 = arith.addi %17, %16 : vector<8x8xi32>
      %19 = arith.cmpi sle, %18, %15 : vector<8x8xi32>
      %c0 = arith.constant 0 : index
      %c0_6 = arith.constant 0 : index
      %c0_7 = arith.constant 0 : index
      %20 = vector.load %arg3[%c0, %c0_6, %c0_7] : memref<1x8x32xf32, #tpu.memory_space<vmem>>, vector<1x8x8xf32>
      %21 = vector.shape_cast %20 : vector<1x8x8xf32> to vector<8x8xf32>
      %c0_8 = arith.constant 0 : index
      %c0_9 = arith.constant 0 : index
      %c0_10 = arith.constant 0 : index
      %22 = vector.load %arg4[%c0_8, %c0_9, %c0_10] : memref<1x8x32xf32, #tpu.memory_space<vmem>>, vector<1x8x8xf32>
      %23 = vector.shape_cast %22 : vector<1x8x8xf32> to vector<8x8xf32>
      %c0_11 = arith.constant 0 : index
      %c0_12 = arith.constant 0 : index
      %c0_13 = arith.constant 0 : index
      %24 = vector.load %arg5[%c0_11, %c0_12, %c0_13] : memref<1x8x32xf32, #tpu.memory_space<vmem>>, vector<1x8x8xf32>
      %25 = vector.shape_cast %24 : vector<1x8x8xf32> to vector<8x8xf32>
      %cst = arith.constant dense<0.000000e+00> : vector<8x8xf32>
      %26 = tpu.matmul %21, %23, %cst {dimension_numbers = #tpu.dot_dimension_numbers<[1], [1], [0], [0], [0, 0, 1, 0], [], []>} : vector<8x8xf32>, vector<8x8xf32>, vector<8x8xf32> -> vector<8x8xf32>
      %cst_14 = arith.constant 0.353553385 : f32
      %27 = vector.broadcast %cst_14 : f32 to vector<8x8xf32>
      %28 = arith.mulf %26, %27 : vector<8x8xf32>
      %cst_15 = arith.constant -1.000000e+30 : f32
      %29 = vector.broadcast %cst_15 : f32 to vector<8x8xf32>
      %30 = arith.select %19, %28, %29 : vector<8x8xi1>, vector<8x8xf32>
      %c0_16 = arith.constant 0 : index
      %c0_17 = arith.constant 0 : index
      %c0_18 = arith.constant 0 : index
      %31 = vector.load %arg7[%c0_16, %c0_17, %c0_18] : memref<4x8x1xf32, #tpu.memory_space<vmem>>, vector<1x8x1xf32>
      %32 = vector.shape_cast %31 : vector<1x8x1xf32> to vector<8x1xf32>
      %cst_19 = arith.constant dense<0xFF800000> : vector<8xf32>
      %33 = vector.multi_reduction <maximumf>, %30, %cst_19 [1] : vector<8x8xf32> to vector<8xf32>
      %34 = vector.shape_cast %33 : vector<8xf32> to vector<8x1xf32>
      %35 = arith.maximumf %32, %34 : vector<8x1xf32>
      %36 = arith.subf %32, %35 : vector<8x1xf32>
      %37 = math.exp %36 : vector<8x1xf32>
      %38 = vector.broadcast %35 : vector<8x1xf32> to vector<8x8xf32>
      %39 = arith.subf %30, %38 : vector<8x8xf32>
      %40 = math.exp %39 : vector<8x8xf32>
      %c0_20 = arith.constant 0 : index
      %c0_21 = arith.constant 0 : index
      %c0_22 = arith.constant 0 : index
      %41 = vector.load %arg8[%c0_20, %c0_21, %c0_22] : memref<4x8x1xf32, #tpu.memory_space<vmem>>, vector<1x8x1xf32>
      %42 = vector.shape_cast %41 : vector<1x8x1xf32> to vector<8x1xf32>
      %43 = arith.mulf %37, %42 : vector<8x1xf32>
      %cst_23 = arith.constant dense<0.000000e+00> : vector<8xf32>
      %44 = vector.multi_reduction <add>, %40, %cst_23 [1] : vector<8x8xf32> to vector<8xf32>
      %45 = vector.shape_cast %44 : vector<8xf32> to vector<8x1xf32>
      %46 = arith.addf %43, %45 : vector<8x1xf32>
      %c0_24 = arith.constant 0 : index
      %c0_25 = arith.constant 0 : index
      %c0_26 = arith.constant 0 : index
      %47 = vector.load %arg8[%c0_24, %c0_25, %c0_26] : memref<4x8x1xf32, #tpu.memory_space<vmem>>, vector<1x8x1xf32>
      %48 = vector.shape_cast %47 : vector<1x8x1xf32> to vector<8x1xf32>
      %49 = vector.shape_cast %46 : vector<8x1xf32> to vector<1x8x1xf32>
      tpu.vector_store %arg8[%c0_24, %c0_25, %c0_26], %49 {strides = array<i32>} : memref<4x8x1xf32, #tpu.memory_space<vmem>>, vector<1x8x1xf32>,
      %c0_27 = arith.constant 0 : index
      %c0_28 = arith.constant 0 : index
      %c0_29 = arith.constant 0 : index
      %50 = vector.load %arg7[%c0_27, %c0_28, %c0_29] : memref<4x8x1xf32, #tpu.memory_space<vmem>>, vector<1x8x1xf32>
      %51 = vector.shape_cast %50 : vector<1x8x1xf32> to vector<8x1xf32>
      %52 = vector.shape_cast %35 : vector<8x1xf32> to vector<1x8x1xf32>
      tpu.vector_store %arg7[%c0_27, %c0_28, %c0_29], %52 {strides = array<i32>} : memref<4x8x1xf32, #tpu.memory_space<vmem>>, vector<1x8x1xf32>,
      %cst_30 = arith.constant dense<0.000000e+00> : vector<8x8xf32>
      %53 = tpu.matmul %40, %25, %cst_30 {dimension_numbers = #tpu.dot_dimension_numbers<[1], [0], [0], [1], [0, 0, 1, 1], [], []>} : vector<8x8xf32>, vector<8x8xf32>, vector<8x8xf32> -> vector<8x8xf32>
      %c0_31 = arith.constant 0 : index
      %c0_32 = arith.constant 0 : index
      %54 = vector.load %arg9[%c0_31, %c0_32] : memref<8x32xf32, #tpu.memory_space<vmem>>, vector<8x8xf32>
      %55 = vector.broadcast %37 : vector<8x1xf32> to vector<8x8xf32>
      %56 = arith.mulf %55, %54 : vector<8x8xf32>
      %57 = arith.addf %56, %53 : vector<8x8xf32>
      %c0_33 = arith.constant 0 : index
      %c0_34 = arith.constant 0 : index
      %58 = vector.load %arg9[%c0_33, %c0_34] : memref<8x32xf32, #tpu.memory_space<vmem>>, vector<8x8xf32>
      tpu.vector_store %arg9[%c0_33, %c0_34], %57 {strides = array<i32>} : memref<8x32xf32, #tpu.memory_space<vmem>>, vector<8x8xf32>,
      %c0_35 = arith.constant 0 : index
      %c0_36 = arith.constant 0 : index
      %c8 = arith.constant 8 : index
      %59 = vector.load %arg3[%c0_35, %c0_36, %c8] : memref<1x8x32xf32, #tpu.memory_space<vmem>>, vector<1x8x8xf32>
      %60 = vector.shape_cast %59 : vector<1x8x8xf32> to vector<8x8xf32>
      %c0_37 = arith.constant 0 : index
      %c0_38 = arith.constant 0 : index
      %c8_39 = arith.constant 8 : index
      %61 = vector.load %arg4[%c0_37, %c0_38, %c8_39] : memref<1x8x32xf32, #tpu.memory_space<vmem>>, vector<1x8x8xf32>
      %62 = vector.shape_cast %61 : vector<1x8x8xf32> to vector<8x8xf32>
      %c0_40 = arith.constant 0 : index
      %c0_41 = arith.constant 0 : index
      %c8_42 = arith.constant 8 : index
      %63 = vector.load %arg5[%c0_40, %c0_41, %c8_42] : memref<1x8x32xf32, #tpu.memory_space<vmem>>, vector<1x8x8xf32>
      %64 = vector.shape_cast %63 : vector<1x8x8xf32> to vector<8x8xf32>
      %cst_43 = arith.constant dense<0.000000e+00> : vector<8x8xf32>
      %65 = tpu.matmul %60, %62, %cst_43 {dimension_numbers = #tpu.dot_dimension_numbers<[1], [1], [0], [0], [0, 0, 1, 0], [], []>} : vector<8x8xf32>, vector<8x8xf32>, vector<8x8xf32> -> vector<8x8xf32>
      %cst_44 = arith.constant 0.353553385 : f32
      %66 = vector.broadcast %cst_44 : f32 to vector<8x8xf32>
      %67 = arith.mulf %65, %66 : vector<8x8xf32>
      %cst_45 = arith.constant -1.000000e+30 : f32
      %68 = vector.broadcast %cst_45 : f32 to vector<8x8xf32>
      %69 = arith.select %19, %67, %68 : vector<8x8xi1>, vector<8x8xf32>
      %c1 = arith.constant 1 : index
      %c0_46 = arith.constant 0 : index
      %c0_47 = arith.constant 0 : index
      %70 = vector.load %arg7[%c1, %c0_46, %c0_47] : memref<4x8x1xf32, #tpu.memory_space<vmem>>, vector<1x8x1xf32>
      %71 = vector.shape_cast %70 : vector<1x8x1xf32> to vector<8x1xf32>
      %cst_48 = arith.constant dense<0xFF800000> : vector<8xf32>
      %72 = vector.multi_reduction <maximumf>, %69, %cst_48 [1] : vector<8x8xf32> to vector<8xf32>
      %73 = vector.shape_cast %72 : vector<8xf32> to vector<8x1xf32>
      %74 = arith.maximumf %71, %73 : vector<8x1xf32>
      %75 = arith.subf %71, %74 : vector<8x1xf32>
      %76 = math.exp %75 : vector<8x1xf32>
      %77 = vector.broadcast %74 : vector<8x1xf32> to vector<8x8xf32>
      %78 = arith.subf %69, %77 : vector<8x8xf32>
      %79 = math.exp %78 : vector<8x8xf32>
      %c1_49 = arith.constant 1 : index
      %c0_50 = arith.constant 0 : index
      %c0_51 = arith.constant 0 : index
      %80 = vector.load %arg8[%c1_49, %c0_50, %c0_51] : memref<4x8x1xf32, #tpu.memory_space<vmem>>, vector<1x8x1xf32>
      %81 = vector.shape_cast %80 : vector<1x8x1xf32> to vector<8x1xf32>
      %82 = arith.mulf %76, %81 : vector<8x1xf32>
      %cst_52 = arith.constant dense<0.000000e+00> : vector<8xf32>
      %83 = vector.multi_reduction <add>, %79, %cst_52 [1] : vector<8x8xf32> to vector<8xf32>
      %84 = vector.shape_cast %83 : vector<8xf32> to vector<8x1xf32>
      %85 = arith.addf %82, %84 : vector<8x1xf32>
      %c1_53 = arith.constant 1 : index
      %c0_54 = arith.constant 0 : index
      %c0_55 = arith.constant 0 : index
      %86 = vector.load %arg8[%c1_53, %c0_54, %c0_55] : memref<4x8x1xf32, #tpu.memory_space<vmem>>, vector<1x8x1xf32>
      %87 = vector.shape_cast %86 : vector<1x8x1xf32> to vector<8x1xf32>
      %88 = vector.shape_cast %85 : vector<8x1xf32> to vector<1x8x1xf32>
      tpu.vector_store %arg8[%c1_53, %c0_54, %c0_55], %88 {strides = array<i32>} : memref<4x8x1xf32, #tpu.memory_space<vmem>>, vector<1x8x1xf32>,
      %c1_56 = arith.constant 1 : index
      %c0_57 = arith.constant 0 : index
      %c0_58 = arith.constant 0 : index
      %89 = vector.load %arg7[%c1_56, %c0_57, %c0_58] : memref<4x8x1xf32, #tpu.memory_space<vmem>>, vector<1x8x1xf32>
      %90 = vector.shape_cast %89 : vector<1x8x1xf32> to vector<8x1xf32>
      %91 = vector.shape_cast %74 : vector<8x1xf32> to vector<1x8x1xf32>
      tpu.vector_store %arg7[%c1_56, %c0_57, %c0_58], %91 {strides = array<i32>} : memref<4x8x1xf32, #tpu.memory_space<vmem>>, vector<1x8x1xf32>,
      %cst_59 = arith.constant dense<0.000000e+00> : vector<8x8xf32>
      %92 = tpu.matmul %79, %64, %cst_59 {dimension_numbers = #tpu.dot_dimension_numbers<[1], [0], [0], [1], [0, 0, 1, 1], [], []>} : vector<8x8xf32>, vector<8x8xf32>, vector<8x8xf32> -> vector<8x8xf32>
      %c0_60 = arith.constant 0 : index
      %c8_61 = arith.constant 8 : index
      %93 = vector.load %arg9[%c0_60, %c8_61] : memref<8x32xf32, #tpu.memory_space<vmem>>, vector<8x8xf32>
      %94 = vector.broadcast %76 : vector<8x1xf32> to vector<8x8xf32>
      %95 = arith.mulf %94, %93 : vector<8x8xf32>
      %96 = arith.addf %95, %92 : vector<8x8xf32>
      %c0_62 = arith.constant 0 : index
      %c8_63 = arith.constant 8 : index
      %97 = vector.load %arg9[%c0_62, %c8_63] : memref<8x32xf32, #tpu.memory_space<vmem>>, vector<8x8xf32>
      tpu.vector_store %arg9[%c0_62, %c8_63], %96 {strides = array<i32>} : memref<8x32xf32, #tpu.memory_space<vmem>>, vector<8x8xf32>,
      %c0_64 = arith.constant 0 : index
      %c0_65 = arith.constant 0 : index
      %c16 = arith.constant 16 : index
      %98 = vector.load %arg3[%c0_64, %c0_65, %c16] : memref<1x8x32xf32, #tpu.memory_space<vmem>>, vector<1x8x8xf32>
      %99 = vector.shape_cast %98 : vector<1x8x8xf32> to vector<8x8xf32>
      %c0_66 = arith.constant 0 : index
      %c0_67 = arith.constant 0 : index
      %c16_68 = arith.constant 16 : index
      %100 = vector.load %arg4[%c0_66, %c0_67, %c16_68] : memref<1x8x32xf32, #tpu.memory_space<vmem>>, vector<1x8x8xf32>
      %101 = vector.shape_cast %100 : vector<1x8x8xf32> to vector<8x8xf32>
      %c0_69 = arith.constant 0 : index
      %c0_70 = arith.constant 0 : index
      %c16_71 = arith.constant 16 : index
      %102 = vector.load %arg5[%c0_69, %c0_70, %c16_71] : memref<1x8x32xf32, #tpu.memory_space<vmem>>, vector<1x8x8xf32>
      %103 = vector.shape_cast %102 : vector<1x8x8xf32> to vector<8x8xf32>
      %cst_72 = arith.constant dense<0.000000e+00> : vector<8x8xf32>
      %104 = tpu.matmul %99, %101, %cst_72 {dimension_numbers = #tpu.dot_dimension_numbers<[1], [1], [0], [0], [0, 0, 1, 0], [], []>} : vector<8x8xf32>, vector<8x8xf32>, vector<8x8xf32> -> vector<8x8xf32>
      %cst_73 = arith.constant 0.353553385 : f32
      %105 = vector.broadcast %cst_73 : f32 to vector<8x8xf32>
      %106 = arith.mulf %104, %105 : vector<8x8xf32>
      %cst_74 = arith.constant -1.000000e+30 : f32
      %107 = vector.broadcast %cst_74 : f32 to vector<8x8xf32>
      %108 = arith.select %19, %106, %107 : vector<8x8xi1>, vector<8x8xf32>
      %c2 = arith.constant 2 : index
      %c0_75 = arith.constant 0 : index
      %c0_76 = arith.constant 0 : index
      %109 = vector.load %arg7[%c2, %c0_75, %c0_76] : memref<4x8x1xf32, #tpu.memory_space<vmem>>, vector<1x8x1xf32>
      %110 = vector.shape_cast %109 : vector<1x8x1xf32> to vector<8x1xf32>
      %cst_77 = arith.constant dense<0xFF800000> : vector<8xf32>
      %111 = vector.multi_reduction <maximumf>, %108, %cst_77 [1] : vector<8x8xf32> to vector<8xf32>
      %112 = vector.shape_cast %111 : vector<8xf32> to vector<8x1xf32>
      %113 = arith.maximumf %110, %112 : vector<8x1xf32>
      %114 = arith.subf %110, %113 : vector<8x1xf32>
      %115 = math.exp %114 : vector<8x1xf32>
      %116 = vector.broadcast %113 : vector<8x1xf32> to vector<8x8xf32>
      %117 = arith.subf %108, %116 : vector<8x8xf32>
      %118 = math.exp %117 : vector<8x8xf32>
      %c2_78 = arith.constant 2 : index
      %c0_79 = arith.constant 0 : index
      %c0_80 = arith.constant 0 : index
      %119 = vector.load %arg8[%c2_78, %c0_79, %c0_80] : memref<4x8x1xf32, #tpu.memory_space<vmem>>, vector<1x8x1xf32>
      %120 = vector.shape_cast %119 : vector<1x8x1xf32> to vector<8x1xf32>
      %121 = arith.mulf %115, %120 : vector<8x1xf32>
      %cst_81 = arith.constant dense<0.000000e+00> : vector<8xf32>
      %122 = vector.multi_reduction <add>, %118, %cst_81 [1] : vector<8x8xf32> to vector<8xf32>
      %123 = vector.shape_cast %122 : vector<8xf32> to vector<8x1xf32>
      %124 = arith.addf %121, %123 : vector<8x1xf32>
      %c2_82 = arith.constant 2 : index
      %c0_83 = arith.constant 0 : index
      %c0_84 = arith.constant 0 : index
      %125 = vector.load %arg8[%c2_82, %c0_83, %c0_84] : memref<4x8x1xf32, #tpu.memory_space<vmem>>, vector<1x8x1xf32>
      %126 = vector.shape_cast %125 : vector<1x8x1xf32> to vector<8x1xf32>
      %127 = vector.shape_cast %124 : vector<8x1xf32> to vector<1x8x1xf32>
      tpu.vector_store %arg8[%c2_82, %c0_83, %c0_84], %127 {strides = array<i32>} : memref<4x8x1xf32, #tpu.memory_space<vmem>>, vector<1x8x1xf32>,
      %c2_85 = arith.constant 2 : index
      %c0_86 = arith.constant 0 : index
      %c0_87 = arith.constant 0 : index
      %128 = vector.load %arg7[%c2_85, %c0_86, %c0_87] : memref<4x8x1xf32, #tpu.memory_space<vmem>>, vector<1x8x1xf32>
      %129 = vector.shape_cast %128 : vector<1x8x1xf32> to vector<8x1xf32>
      %130 = vector.shape_cast %113 : vector<8x1xf32> to vector<1x8x1xf32>
      tpu.vector_store %arg7[%c2_85, %c0_86, %c0_87], %130 {strides = array<i32>} : memref<4x8x1xf32, #tpu.memory_space<vmem>>, vector<1x8x1xf32>,
      %cst_88 = arith.constant dense<0.000000e+00> : vector<8x8xf32>
      %131 = tpu.matmul %118, %103, %cst_88 {dimension_numbers = #tpu.dot_dimension_numbers<[1], [0], [0], [1], [0, 0, 1, 1], [], []>} : vector<8x8xf32>, vector<8x8xf32>, vector<8x8xf32> -> vector<8x8xf32>
      %c0_89 = arith.constant 0 : index
      %c16_90 = arith.constant 16 : index
      %132 = vector.load %arg9[%c0_89, %c16_90] : memref<8x32xf32, #tpu.memory_space<vmem>>, vector<8x8xf32>
      %133 = vector.broadcast %115 : vector<8x1xf32> to vector<8x8xf32>
      %134 = arith.mulf %133, %132 : vector<8x8xf32>
      %135 = arith.addf %134, %131 : vector<8x8xf32>
      %c0_91 = arith.constant 0 : index
      %c16_92 = arith.constant 16 : index
      %136 = vector.load %arg9[%c0_91, %c16_92] : memref<8x32xf32, #tpu.memory_space<vmem>>, vector<8x8xf32>
      tpu.vector_store %arg9[%c0_91, %c16_92], %135 {strides = array<i32>} : memref<8x32xf32, #tpu.memory_space<vmem>>, vector<8x8xf32>,
      %c0_93 = arith.constant 0 : index
      %c0_94 = arith.constant 0 : index
      %c24 = arith.constant 24 : index
      %137 = vector.load %arg3[%c0_93, %c0_94, %c24] : memref<1x8x32xf32, #tpu.memory_space<vmem>>, vector<1x8x8xf32>
      %138 = vector.shape_cast %137 : vector<1x8x8xf32> to vector<8x8xf32>
      %c0_95 = arith.constant 0 : index
      %c0_96 = arith.constant 0 : index
      %c24_97 = arith.constant 24 : index
      %139 = vector.load %arg4[%c0_95, %c0_96, %c24_97] : memref<1x8x32xf32, #tpu.memory_space<vmem>>, vector<1x8x8xf32>
      %140 = vector.shape_cast %139 : vector<1x8x8xf32> to vector<8x8xf32>
      %c0_98 = arith.constant 0 : index
      %c0_99 = arith.constant 0 : index
      %c24_100 = arith.constant 24 : index
      %141 = vector.load %arg5[%c0_98, %c0_99, %c24_100] : memref<1x8x32xf32, #tpu.memory_space<vmem>>, vector<1x8x8xf32>
      %142 = vector.shape_cast %141 : vector<1x8x8xf32> to vector<8x8xf32>
      %cst_101 = arith.constant dense<0.000000e+00> : vector<8x8xf32>
      %143 = tpu.matmul %138, %140, %cst_101 {dimension_numbers = #tpu.dot_dimension_numbers<[1], [1], [0], [0], [0, 0, 1, 0], [], []>} : vector<8x8xf32>, vector<8x8xf32>, vector<8x8xf32> -> vector<8x8xf32>
      %cst_102 = arith.constant 0.353553385 : f32
      %144 = vector.broadcast %cst_102 : f32 to vector<8x8xf32>
      %145 = arith.mulf %143, %144 : vector<8x8xf32>
      %cst_103 = arith.constant -1.000000e+30 : f32
      %146 = vector.broadcast %cst_103 : f32 to vector<8x8xf32>
      %147 = arith.select %19, %145, %146 : vector<8x8xi1>, vector<8x8xf32>
      %c3 = arith.constant 3 : index
      %c0_104 = arith.constant 0 : index
      %c0_105 = arith.constant 0 : index
      %148 = vector.load %arg7[%c3, %c0_104, %c0_105] : memref<4x8x1xf32, #tpu.memory_space<vmem>>, vector<1x8x1xf32>
      %149 = vector.shape_cast %148 : vector<1x8x1xf32> to vector<8x1xf32>
      %cst_106 = arith.constant dense<0xFF800000> : vector<8xf32>
      %150 = vector.multi_reduction <maximumf>, %147, %cst_106 [1] : vector<8x8xf32> to vector<8xf32>
      %151 = vector.shape_cast %150 : vector<8xf32> to vector<8x1xf32>
      %152 = arith.maximumf %149, %151 : vector<8x1xf32>
      %153 = arith.subf %149, %152 : vector<8x1xf32>
      %154 = math.exp %153 : vector<8x1xf32>
      %155 = vector.broadcast %152 : vector<8x1xf32> to vector<8x8xf32>
      %156 = arith.subf %147, %155 : vector<8x8xf32>
      %157 = math.exp %156 : vector<8x8xf32>
      %c3_107 = arith.constant 3 : index
      %c0_108 = arith.constant 0 : index
      %c0_109 = arith.constant 0 : index
      %158 = vector.load %arg8[%c3_107, %c0_108, %c0_109] : memref<4x8x1xf32, #tpu.memory_space<vmem>>, vector<1x8x1xf32>
      %159 = vector.shape_cast %158 : vector<1x8x1xf32> to vector<8x1xf32>
      %160 = arith.mulf %154, %159 : vector<8x1xf32>
      %cst_110 = arith.constant dense<0.000000e+00> : vector<8xf32>
      %161 = vector.multi_reduction <add>, %157, %cst_110 [1] : vector<8x8xf32> to vector<8xf32>
      %162 = vector.shape_cast %161 : vector<8xf32> to vector<8x1xf32>
      %163 = arith.addf %160, %162 : vector<8x1xf32>
      %c3_111 = arith.constant 3 : index
      %c0_112 = arith.constant 0 : index
      %c0_113 = arith.constant 0 : index
      %164 = vector.load %arg8[%c3_111, %c0_112, %c0_113] : memref<4x8x1xf32, #tpu.memory_space<vmem>>, vector<1x8x1xf32>
      %165 = vector.shape_cast %164 : vector<1x8x1xf32> to vector<8x1xf32>
      %166 = vector.shape_cast %163 : vector<8x1xf32> to vector<1x8x1xf32>
      tpu.vector_store %arg8[%c3_111, %c0_112, %c0_113], %166 {strides = array<i32>} : memref<4x8x1xf32, #tpu.memory_space<vmem>>, vector<1x8x1xf32>,
      %c3_114 = arith.constant 3 : index
      %c0_115 = arith.constant 0 : index
      %c0_116 = arith.constant 0 : index
      %167 = vector.load %arg7[%c3_114, %c0_115, %c0_116] : memref<4x8x1xf32, #tpu.memory_space<vmem>>, vector<1x8x1xf32>
      %168 = vector.shape_cast %167 : vector<1x8x1xf32> to vector<8x1xf32>
      %169 = vector.shape_cast %152 : vector<8x1xf32> to vector<1x8x1xf32>
      tpu.vector_store %arg7[%c3_114, %c0_115, %c0_116], %169 {strides = array<i32>} : memref<4x8x1xf32, #tpu.memory_space<vmem>>, vector<1x8x1xf32>,
      %cst_117 = arith.constant dense<0.000000e+00> : vector<8x8xf32>
      %170 = tpu.matmul %157, %142, %cst_117 {dimension_numbers = #tpu.dot_dimension_numbers<[1], [0], [0], [1], [0, 0, 1, 1], [], []>} : vector<8x8xf32>, vector<8x8xf32>, vector<8x8xf32> -> vector<8x8xf32>
      %c0_118 = arith.constant 0 : index
      %c24_119 = arith.constant 24 : index
      %171 = vector.load %arg9[%c0_118, %c24_119] : memref<8x32xf32, #tpu.memory_space<vmem>>, vector<8x8xf32>
      %172 = vector.broadcast %154 : vector<8x1xf32> to vector<8x8xf32>
      %173 = arith.mulf %172, %171 : vector<8x8xf32>
      %174 = arith.addf %173, %170 : vector<8x8xf32>
      %c0_120 = arith.constant 0 : index
      %c24_121 = arith.constant 24 : index
      %175 = vector.load %arg9[%c0_120, %c24_121] : memref<8x32xf32, #tpu.memory_space<vmem>>, vector<8x8xf32>
      tpu.vector_store %arg9[%c0_120, %c24_121], %174 {strides = array<i32>} : memref<8x32xf32, #tpu.memory_space<vmem>>, vector<8x8xf32>,
    } else {
    }
    %c1_i32_4 = arith.constant 1 : i32
    %10 = arith.cmpi eq, %arg2, %c1_i32_4 : i32
    %11 = arith.extui %10 : i1 to i32
    %c0_i32_5 = arith.constant 0 : i32
    %12 = arith.cmpi ne, %11, %c0_i32_5 : i32
    scf.if %12 {
      %c0 = arith.constant 0 : index
      %c0_6 = arith.constant 0 : index
      %c0_7 = arith.constant 0 : index
      %13 = vector.load %arg8[%c0, %c0_6, %c0_7] : memref<4x8x1xf32, #tpu.memory_space<vmem>>, vector<1x8x1xf32>
      %14 = vector.shape_cast %13 : vector<1x8x1xf32> to vector<8x1xf32>
      %15 = tpu.reciprocal %14 : vector<8x1xf32> -> vector<8x1xf32>
      %c0_8 = arith.constant 0 : index
      %c0_9 = arith.constant 0 : index
      %16 = vector.load %arg9[%c0_8, %c0_9] : memref<8x32xf32, #tpu.memory_space<vmem>>, vector<8x8xf32>
      %17 = vector.broadcast %15 : vector<8x1xf32> to vector<8x8xf32>
      %18 = arith.mulf %16, %17 : vector<8x8xf32>
      %c0_10 = arith.constant 0 : index
      %c0_11 = arith.constant 0 : index
      %19 = vector.load %arg9[%c0_10, %c0_11] : memref<8x32xf32, #tpu.memory_space<vmem>>, vector<8x8xf32>
      tpu.vector_store %arg9[%c0_10, %c0_11], %18 {strides = array<i32>} : memref<8x32xf32, #tpu.memory_space<vmem>>, vector<8x8xf32>,
      %c1 = arith.constant 1 : index
      %c0_12 = arith.constant 0 : index
      %c0_13 = arith.constant 0 : index
      %20 = vector.load %arg8[%c1, %c0_12, %c0_13] : memref<4x8x1xf32, #tpu.memory_space<vmem>>, vector<1x8x1xf32>
      %21 = vector.shape_cast %20 : vector<1x8x1xf32> to vector<8x1xf32>
      %22 = tpu.reciprocal %21 : vector<8x1xf32> -> vector<8x1xf32>
      %c0_14 = arith.constant 0 : index
      %c8 = arith.constant 8 : index
      %23 = vector.load %arg9[%c0_14, %c8] : memref<8x32xf32, #tpu.memory_space<vmem>>, vector<8x8xf32>
      %24 = vector.broadcast %22 : vector<8x1xf32> to vector<8x8xf32>
      %25 = arith.mulf %23, %24 : vector<8x8xf32>
      %c0_15 = arith.constant 0 : index
      %c8_16 = arith.constant 8 : index
      %26 = vector.load %arg9[%c0_15, %c8_16] : memref<8x32xf32, #tpu.memory_space<vmem>>, vector<8x8xf32>
      tpu.vector_store %arg9[%c0_15, %c8_16], %25 {strides = array<i32>} : memref<8x32xf32, #tpu.memory_space<vmem>>, vector<8x8xf32>,
      %c2 = arith.constant 2 : index
      %c0_17 = arith.constant 0 : index
      %c0_18 = arith.constant 0 : index
      %27 = vector.load %arg8[%c2, %c0_17, %c0_18] : memref<4x8x1xf32, #tpu.memory_space<vmem>>, vector<1x8x1xf32>
      %28 = vector.shape_cast %27 : vector<1x8x1xf32> to vector<8x1xf32>
      %29 = tpu.reciprocal %28 : vector<8x1xf32> -> vector<8x1xf32>
      %c0_19 = arith.constant 0 : index
      %c16 = arith.constant 16 : index
      %30 = vector.load %arg9[%c0_19, %c16] : memref<8x32xf32, #tpu.memory_space<vmem>>, vector<8x8xf32>
      %31 = vector.broadcast %29 : vector<8x1xf32> to vector<8x8xf32>
      %32 = arith.mulf %30, %31 : vector<8x8xf32>
      %c0_20 = arith.constant 0 : index
      %c16_21 = arith.constant 16 : index
      %33 = vector.load %arg9[%c0_20, %c16_21] : memref<8x32xf32, #tpu.memory_space<vmem>>, vector<8x8xf32>
      tpu.vector_store %arg9[%c0_20, %c16_21], %32 {strides = array<i32>} : memref<8x32xf32, #tpu.memory_space<vmem>>, vector<8x8xf32>,
      %c3 = arith.constant 3 : index
      %c0_22 = arith.constant 0 : index
      %c0_23 = arith.constant 0 : index
      %34 = vector.load %arg8[%c3, %c0_22, %c0_23] : memref<4x8x1xf32, #tpu.memory_space<vmem>>, vector<1x8x1xf32>
      %35 = vector.shape_cast %34 : vector<1x8x1xf32> to vector<8x1xf32>
      %36 = tpu.reciprocal %35 : vector<8x1xf32> -> vector<8x1xf32>
      %c0_24 = arith.constant 0 : index
      %c24 = arith.constant 24 : index
      %37 = vector.load %arg9[%c0_24, %c24] : memref<8x32xf32, #tpu.memory_space<vmem>>, vector<8x8xf32>
      %38 = vector.broadcast %36 : vector<8x1xf32> to vector<8x8xf32>
      %39 = arith.mulf %37, %38 : vector<8x8xf32>
      %c0_25 = arith.constant 0 : index
      %c24_26 = arith.constant 24 : index
      %40 = vector.load %arg9[%c0_25, %c24_26] : memref<8x32xf32, #tpu.memory_space<vmem>>, vector<8x8xf32>
      tpu.vector_store %arg9[%c0_25, %c24_26], %39 {strides = array<i32>} : memref<8x32xf32, #tpu.memory_space<vmem>>, vector<8x8xf32>,
      %c0_27 = arith.constant 0 : index
      %c0_28 = arith.constant 0 : index
      %41 = vector.load %arg9[%c0_27, %c0_28] : memref<8x32xf32, #tpu.memory_space<vmem>>, vector<8x32xf32>
      %c0_29 = arith.constant 0 : index
      %c0_30 = arith.constant 0 : index
      %c0_31 = arith.constant 0 : index
      %42 = vector.load %arg6[%c0_29, %c0_30, %c0_31] : memref<1x8x32xf32, #tpu.memory_space<vmem>>, vector<1x8x32xf32>
      %43 = vector.shape_cast %42 : vector<1x8x32xf32> to vector<8x32xf32>
      %44 = vector.shape_cast %41 : vector<8x32xf32> to vector<1x8x32xf32>
      tpu.vector_store %arg6[%c0_29, %c0_30, %c0_31], %44 {strides = array<i32>} : memref<1x8x32xf32, #tpu.memory_space<vmem>>, vector<1x8x32xf32>,
    } else {
    }
    return
  }
  func.func @transform_0(%arg0: i32, %arg1: i32, %arg2: i32) -> (i32, i32, i32) {
    %c0_i32 = arith.constant 0 : i32
    %c0_i32_0 = arith.constant 0 : i32
    return %arg0, %arg1, %c0_i32 : i32, i32, i32
  }
  func.func @transform_1(%arg0: i32, %arg1: i32, %arg2: i32) -> (i32, i32, i32) {
    %c0_i32 = arith.constant 0 : i32
    %c0_i32_0 = arith.constant 0 : i32
    return %arg0, %arg2, %c0_i32 : i32, i32, i32
  }
  func.func @transform_2(%arg0: i32, %arg1: i32, %arg2: i32) -> (i32, i32, i32) {
    %c0_i32 = arith.constant 0 : i32
    %c0_i32_0 = arith.constant 0 : i32
    return %arg0, %arg2, %c0_i32 : i32, i32, i32
  }
  func.func @transform_3(%arg0: i32, %arg1: i32, %arg2: i32) -> (i32, i32, i32) {
    %c0_i32 = arith.constant 0 : i32
    %c0_i32_0 = arith.constant 0 : i32
    return %arg0, %arg1, %c0_i32 : i32, i32, i32
  }
}

</mosaic_0001>

<llo_original>
// kernel: tpu_custom_call.1
$region0: #{tpu_custom_call.1}
  #allocation0 [shape = 'u32[]', space=smem, size = 0x4, offset = 0x4, fixed_abs, tag = 'smem constant byte address 0x4 - core index']
  #allocation1 [shape = 'u32[72,128]{1,0:T(1,128)}', space=vmem, size = 0x9000, scoped, tag = 'internal scratch']
  #allocation2 [shape = 'f32[4,8,1]{2,1,0:T(8,128)}', space=vmem, size = 0x4000, scoped, tag = 'scratch operand']
  #allocation3 [shape = 'f32[4,8,1]{2,1,0:T(8,128)}', space=vmem, size = 0x4000, scoped, tag = 'scratch operand']
  #allocation4 [shape = 'f32[8,32]{1,0:T(8,128)}', space=vmem, size = 0x1000, scoped, tag = 'scratch operand']
  %s0 = inlined_call_operand.hbm [shape: f32[2,16,32], index: 0, kind: input, shape index: {}]
  %s1 = inlined_call_operand.hbm [shape: f32[2,16,32], index: 1, kind: input, shape index: {}]
  %s2 = inlined_call_operand.hbm [shape: f32[2,16,32], index: 2, kind: input, shape index: {}]
  %s3 = inlined_call_operand.hbm [shape: f32[2,16,32], index: 3, kind: output, shape index: {}]
  %s4 = sld [smem:[#allocation0]]
  $region69: #{tpu_custom_call.1} parent=0
    _
  %s6 = ssub.s32 1, %s4
  %s7 = scalar_select 0, %s6, %s4
  $region1: #{tpu_custom_call.1} parent=0
    #allocation5 [shape = 'u8[8192]{0}', space=vmem, size = 0x2000, scoped, tag = 'input window, operand 0']
    #allocation6 [shape = 's32[2]{0}', space=sflag, size = 0x8, scoped, tag = 'scoped memory for tpu_custom_call.1']
    #allocation7 [shape = 's32[2]{0}', space=sflag, size = 0x8, scoped, tag = 'scoped memory for tpu_custom_call.1']
    #allocation8 [shape = 'u8[8192]{0}', space=vmem, size = 0x2000, scoped, tag = 'input window, operand 1']
    #allocation9 [shape = 's32[2]{0}', space=sflag, size = 0x8, scoped, tag = 'scoped memory for tpu_custom_call.1']
    #allocation10 [shape = 'u8[8192]{0}', space=vmem, size = 0x2000, scoped, tag = 'input window, operand 2']
    #allocation11 [shape = 'u8[8192]{0}', space=vmem, size = 0x2000, scoped, tag = 'output window, operand 0']
    %8 = vsyncpa [#allocation6], 0
    %s9 = scalar_lea.sflag [#allocation6], 1
    %10 = vsyncpa %s9, 0
    %11 = vsyncpa [#allocation9], 0
    %s12 = scalar_lea.sflag [#allocation9], 1
    %13 = vsyncpa %s12, 0
    %14 = vsyncpa [#allocation7], 0
    %s15 = scalar_lea.sflag [#allocation7], 1
    %16 = vsyncpa %s15, 0
    loop: start=0, step=1, limit=10
    $region2: #{tpu_custom_call.1} parent=1 // loop_pre_header
      _
    $region3: #{tpu_custom_call.1} parent=1 // loop_header
      %s18 = sphi 0, %s22
      %p19 = scmp.ge.s32.totalorder %s18, 10
      %s25 = sphi 0, %s44
      %s26 = sphi 0, %s40
      %s27 = sphi 0, %s36
      %s28 = sphi 0, %s25
      %s29 = sphi 0, %s26
      %s30 = sphi 0, %s27
      %s31 = sphi 0, %s28
      %s32 = sphi 0, %s29
      %s33 = sphi 0, %s30
      %s49 = sphi 0, %s51
      %s52 = sphi 0, %s49
      %s53 = sphi 0, %s52
      %s69 = sphi 0, %s53
      %s77 = sphi 0, %s79
      %s80 = sphi 0, %s77
      %s81 = sphi 0, %s80
      %s97 = sphi 0, %s81
      %s105 = sphi 0, %s107
      %s108 = sphi 0, %s105
      %s109 = sphi 0, %s108
      %s125 = sphi 0, %s109
      %s133 = sphi 0, %s135
      %s136 = sphi 0, %s133
      %s137 = sphi 0, %s136
      %s153 = sphi 0, %s137
    $region4: #{tpu_custom_call.1} parent=1 // loop_header_branch
      %21 = sbr.rel (%p19) target = $region8
    $region5: #{tpu_custom_call.1} parent=1 // loop_body
      %s23 = ssub.s32 %s18, 1
      %s24 = ssub.s32 %s18, 2
      %s34 = sadd.s32 1, %s27
      %p35 = scmp.ge.s32.totalorder %s34, 2
      %s36 = scalar_select %p35, 0, %s34
      %s37 = sadd.s32 1, %s26
      %s38 = scalar_select %p35, %s37, %s26
      %p39 = scmp.ge.s32.totalorder %s38, 2
      %s40 = scalar_select %p39, 0, %s38
      %s41 = sadd.s32 1, %s25
      %s42 = scalar_select %p39, %s41, %s25
      %p43 = scmp.ge.s32.totalorder %s42, 2
      %s44 = scalar_select %p43, 0, %s42
      %s45 = ssub.s32 %s25, %s44
      %s46 = ssub.s32 %s26, %s40
      %s47 = sor.u32 %s45, %s46
      %p48 = scmp.eq.s32.totalorder %s47, 0
      %s50 = sadd.s32 %s49, 1
      %s51 = scalar_select %p48, %s49, %s50
      %p54 = pneg %p48
      %p55 = scmp.eq.s32.totalorder %s18, 7
      %p56 = por %p54, %p55
      %p57 = scmp.ne.s32.totalorder %s49, %s52
      %p58 = scmp.eq.s32.totalorder %s18, 0
      %p59 = por %p57, %p58
      %p60 = scmp.ne.s32.totalorder %s49, %s52
      %p61 = scmp.eq.s32.totalorder %s23, 7
      %p62 = por %p60, %p61
      %p63 = scmp.ne.s32.totalorder %s52, %s53
      %p64 = scmp.eq.s32.totalorder %s23, 0
      %p65 = por %p63, %p64
      %p66 = scmp.ne.s32.totalorder %s52, %s53
      %p67 = scmp.eq.s32.totalorder %s24, 7
      %p68 = por %p66, %p67
      %p70 = scmp.ne.s32.totalorder %s53, %s69
      %p71 = scmp.eq.s32.totalorder %s24, 0
      %p72 = por %p70, %p71
      %s73 = ssub.s32 %s25, %s44
      %s74 = ssub.s32 %s27, %s36
      %s75 = sor.u32 %s73, %s74
      %p76 = scmp.eq.s32.totalorder %s75, 0
      %s78 = sadd.s32 %s77, 1
      %s79 = scalar_select %p76, %s77, %s78
      %p82 = pneg %p76
      %p83 = scmp.eq.s32.totalorder %s18, 7
      %p84 = por %p82, %p83
      %p85 = scmp.ne.s32.totalorder %s77, %s80
      %p86 = scmp.eq.s32.totalorder %s18, 0
      %p87 = por %p85, %p86
      %p88 = scmp.ne.s32.totalorder %s77, %s80
      %p89 = scmp.eq.s32.totalorder %s23, 7
      %p90 = por %p88, %p89
      %p91 = scmp.ne.s32.totalorder %s80, %s81
      %p92 = scmp.eq.s32.totalorder %s23, 0
      %p93 = por %p91, %p92
      %p94 = scmp.ne.s32.totalorder %s80, %s81
      %p95 = scmp.eq.s32.totalorder %s24, 7
      %p96 = por %p94, %p95
      %p98 = scmp.ne.s32.totalorder %s81, %s97
      %p99 = scmp.eq.s32.totalorder %s24, 0
      %p100 = por %p98, %p99
      %s101 = ssub.s32 %s25, %s44
      %s102 = ssub.s32 %s27, %s36
      %s103 = sor.u32 %s101, %s102
      %p104 = scmp.eq.s32.totalorder %s103, 0
      %s106 = sadd.s32 %s105, 1
      %s107 = scalar_select %p104, %s105, %s106
      %p110 = pneg %p104
      %p111 = scmp.eq.s32.totalorder %s18, 7
      %p112 = por %p110, %p111
      %p113 = scmp.ne.s32.totalorder %s105, %s108
      %p114 = scmp.eq.s32.totalorder %s18, 0
      %p115 = por %p113, %p114
      %p116 = scmp.ne.s32.totalorder %s105, %s108
      %p117 = scmp.eq.s32.totalorder %s23, 7
      %p118 = por %p116, %p117
      %p119 = scmp.ne.s32.totalorder %s108, %s109
      %p120 = scmp.eq.s32.totalorder %s23, 0
      %p121 = por %p119, %p120
      %p122 = scmp.ne.s32.totalorder %s108, %s109
      %p123 = scmp.eq.s32.totalorder %s24, 7
      %p124 = por %p122, %p123
      %p126 = scmp.ne.s32.totalorder %s109, %s125
      %p127 = scmp.eq.s32.totalorder %s24, 0
      %p128 = por %p126, %p127
      %s129 = ssub.s32 %s25, %s44
      %s130 = ssub.s32 %s26, %s40
      %s131 = sor.u32 %s129, %s130
      %p132 = scmp.eq.s32.totalorder %s131, 0
      %s134 = sadd.s32 %s133, 1
      %s135 = scalar_select %p132, %s133, %s134
      %p138 = pneg %p132
      %p139 = scmp.eq.s32.totalorder %s18, 7
      %p140 = por %p138, %p139
      %p141 = scmp.ne.s32.totalorder %s133, %s136
      %p142 = scmp.eq.s32.totalorder %s18, 0
      %p143 = por %p141, %p142
      %p144 = scmp.ne.s32.totalorder %s133, %s136
      %p145 = scmp.eq.s32.totalorder %s23, 7
      %p146 = por %p144, %p145
      %p147 = scmp.ne.s32.totalorder %s136, %s137
      %p148 = scmp.eq.s32.totalorder %s23, 0
      %p149 = por %p147, %p148
      %p150 = scmp.ne.s32.totalorder %s136, %s137
      %p151 = scmp.eq.s32.totalorder %s24, 7
      %p152 = por %p150, %p151
      %p154 = scmp.ne.s32.totalorder %s137, %s153
      %p155 = scmp.eq.s32.totalorder %s24, 0
      %p156 = por %p154, %p155
      %p157 = scmp.le.s32.totalorder 1, %s18
      %p158 = scmp.lt.s32.totalorder %s18, 9
      %p159 = pnand %p157, %p158
      %p160 = pneg %p159
      // Predicated region
      $region9: #{tpu_custom_call.1} parent=5 // pred_check
        _
      $region10: #{tpu_custom_call.1} parent=5 // pred_check_branch
        %162 = sbr.rel (%p159) target = $region12
      $region11: #{tpu_custom_call.1} parent=5 // pred_region
        %s163 = ssub.s32 %s18, 1
      $region12: #{tpu_custom_call.1} parent=5 // pred_fallthru
        _
      %p164 = scmp.lt.s32.totalorder %s18, 8
      // Predicated region
      $region13: #{tpu_custom_call.1} parent=5 // pred_check
        %p165 = pneg %p164
      $region14: #{tpu_custom_call.1} parent=5 // pred_check_branch
        %167 = sbr.rel (%p165) target = $region16
      $region15: #{tpu_custom_call.1} parent=5 // pred_region
        // Predicated region
        $region17: #{tpu_custom_call.1} parent=15 // pred_check
          %p168 = pneg %p59
        $region18: #{tpu_custom_call.1} parent=15 // pred_check_branch
          %170 = sbr.rel (%p168) target = $region20
        $region19: #{tpu_custom_call.1} parent=15 // pred_region
          %s171 = sand.u32 %s49, 1
          %s172 = scalar_lea.sflag [#allocation6], %s171
          %s173 = sand.u32 %s49, 1
          %s174 = smul.addr %s173, 8
          %s175 = scalar_lea.vmem [#allocation5], %s174
          %177 = vsyncadd %s172, 0
          %s178 = smul.addr %s25, 2
          %s179 = sadd.s32 %s26, %s178
          %s180 = smul.addr %s179, 8
          %s181 = scalar_lea.hbm %s0, %s180
          %s183 = sshll.u32 %s181, 4
          %s184 = int_to_ptr.hbm [resolvable:$true] %s183
          %s185 = sshll.u32 %s175, 4
          %s186 = int_to_ptr.vmem [resolvable:$true] %s185
          %188 = dma.hbm_to_vmem [thread:$0]  %s184, 128, %s186, %s172
        $region20: #{tpu_custom_call.1} parent=15 // pred_fallthru
          _
        // Predicated region
        $region21: #{tpu_custom_call.1} parent=15 // pred_check
          %p189 = pneg %p87
        $region22: #{tpu_custom_call.1} parent=15 // pred_check_branch
          %191 = sbr.rel (%p189) target = $region24
        $region23: #{tpu_custom_call.1} parent=15 // pred_region
          %s192 = sand.u32 %s18, 1
          %s193 = scalar_lea.sflag [#allocation9], %s192
          %s194 = sand.u32 %s77, 1
          %s195 = smul.addr %s194, 8
          %s196 = scalar_lea.vmem [#allocation8], %s195
          %198 = vsyncadd %s193, 0
          %s199 = smul.addr %s25, 2
          %s200 = sadd.s32 %s27, %s199
          %s201 = smul.addr %s200, 8
          %s202 = scalar_lea.hbm %s1, %s201
          %s204 = sshll.u32 %s202, 4
          %s205 = int_to_ptr.hbm [resolvable:$true] %s204
          %s206 = sshll.u32 %s196, 4
          %s207 = int_to_ptr.vmem [resolvable:$true] %s206
          %209 = dma.hbm_to_vmem [thread:$0]  %s205, 128, %s207, %s193
        $region24: #{tpu_custom_call.1} parent=15 // pred_fallthru
          _
        // Predicated region
        $region25: #{tpu_custom_call.1} parent=15 // pred_check
          %p210 = pneg %p115
        $region26: #{tpu_custom_call.1} parent=15 // pred_check_branch
          %212 = sbr.rel (%p210) target = $region28
        $region27: #{tpu_custom_call.1} parent=15 // pred_region
          %s213 = sand.u32 %s18, 1
          %s214 = scalar_lea.sflag [#allocation9], %s213
          %s215 = sand.u32 %s105, 1
          %s216 = smul.addr %s215, 8
          %s217 = scalar_lea.vmem [#allocation10], %s216
          %219 = vsyncadd %s214, 0
          %s220 = smul.addr %s25, 2
          %s221 = sadd.s32 %s27, %s220
          %s222 = smul.addr %s221, 8
          %s223 = scalar_lea.hbm %s2, %s222
          %s225 = sshll.u32 %s223, 4
          %s226 = int_to_ptr.hbm [resolvable:$true] %s225
          %s227 = sshll.u32 %s217, 4
          %s228 = int_to_ptr.vmem [resolvable:$true] %s227
          %230 = dma.hbm_to_vmem [thread:$0]  %s226, 128, %s228, %s214
        $region28: #{tpu_custom_call.1} parent=15 // pred_fallthru
          _
      $region16: #{tpu_custom_call.1} parent=5 // pred_fallthru
        _
      %p231 = scmp.le.s32.totalorder 1, %s18
      %p232 = scmp.lt.s32.totalorder %s18, 9
      %p233 = pnand %p231, %p232
      %p234 = pneg %p233
      // Predicated region
      $region29: #{tpu_custom_call.1} parent=5 // pred_check
        _
      $region30: #{tpu_custom_call.1} parent=5 // pred_check_branch
        %236 = sbr.rel (%p233) target = $region32
      $region31: #{tpu_custom_call.1} parent=5 // pred_region
        %s237 = ssub.s32 %s18, 1
        %s238 = sand.u32 %s52, 1
        %s239 = scalar_lea.sflag [#allocation6], %s238
        %s240 = sand.u32 %s52, 1
        %s241 = smul.addr %s240, 8
        %s242 = scalar_lea.vmem [#allocation5], %s241
        // Predicated region
        $region33: #{tpu_custom_call.1} parent=31 // pred_check
          %p243 = pneg %p65
        $region34: #{tpu_custom_call.1} parent=31 // pred_check_branch
          %245 = sbr.rel (%p243) target = $region36
        $region35: #{tpu_custom_call.1} parent=31 // pred_region
          %247 = dma.done %s239, 128
        $region36: #{tpu_custom_call.1} parent=31 // pred_fallthru
          _
        %s248 = sand.u32 %s23, 1
        %s249 = scalar_lea.sflag [#allocation9], %s248
        %s250 = sand.u32 %s80, 1
        %s251 = smul.addr %s250, 8
        %s252 = scalar_lea.vmem [#allocation8], %s251
        // Predicated region
        $region37: #{tpu_custom_call.1} parent=31 // pred_check
          %p253 = pneg %p93
        $region38: #{tpu_custom_call.1} parent=31 // pred_check_branch
          %255 = sbr.rel (%p253) target = $region40
        $region39: #{tpu_custom_call.1} parent=31 // pred_region
          %257 = dma.done %s249, 128
        $region40: #{tpu_custom_call.1} parent=31 // pred_fallthru
          _
        %s258 = sand.u32 %s23, 1
        %s259 = scalar_lea.sflag [#allocation9], %s258
        %s260 = sand.u32 %s108, 1
        %s261 = smul.addr %s260, 8
        %s262 = scalar_lea.vmem [#allocation10], %s261
        // Predicated region
        $region41: #{tpu_custom_call.1} parent=31 // pred_check
          %p263 = pneg %p121
        $region42: #{tpu_custom_call.1} parent=31 // pred_check_branch
          %265 = sbr.rel (%p263) target = $region44
        $region43: #{tpu_custom_call.1} parent=31 // pred_region
          %267 = dma.done %s259, 128
        $region44: #{tpu_custom_call.1} parent=31 // pred_fallthru
          _
        %s268 = sand.u32 %s52, 1
        %s269 = scalar_lea.sflag [#allocation6], %s268
        %s270 = sand.u32 %s52, 1
        %s271 = smul.addr %s270, 8
        %s272 = scalar_lea.vmem [#allocation5], %s271
        %p273 = pneg %p65
        %p274 = pneg %p62
        %s275 = sand.u32 %s23, 1
        %s276 = scalar_lea.sflag [#allocation9], %s275
        %s277 = sand.u32 %s80, 1
        %s278 = smul.addr %s277, 8
        %s279 = scalar_lea.vmem [#allocation8], %s278
        %p280 = pneg %p93
        %p281 = pneg %p90
        %s282 = sand.u32 %s23, 1
        %s283 = scalar_lea.sflag [#allocation9], %s282
        %s284 = sand.u32 %s108, 1
        %s285 = smul.addr %s284, 8
        %s286 = scalar_lea.vmem [#allocation10], %s285
        %p287 = pneg %p121
        %p288 = pneg %p118
        %p289 = pneg %p149
        %p290 = pneg %p146
        %s291 = sand.u32 %s136, 1
        %s292 = scalar_lea.sflag [#allocation7], %s291
        %s293 = sand.u32 %s136, 1
        %s294 = smul.addr %s293, 8
        %s295 = scalar_lea.vmem [#allocation11], %s294
        %p296 = scmp.eq.s32.totalorder %s30, 0
        // Predicated region
        $region45: #{tpu_custom_call.1} parent=31 // pred_check
          %p297 = pneg %p296
        $region46: #{tpu_custom_call.1} parent=31 // pred_check_branch
          %299 = sbr.rel (%p297) target = $region48
        $region47: #{tpu_custom_call.1} parent=31 // pred_region
          %vm300 = vcmask 7168
          %301 = vst.msk [vmem:[#allocation2] sm:$0xff] %vm300, -inf
          %302 = vst.msk [vmem:[#allocation2 + $0x8] sm:$0xff] %vm300, -inf
          %303 = vst.msk [vmem:[#allocation2 + $0x10] sm:$0xff] %vm300, -inf
          %304 = vst.msk [vmem:[#allocation2 + $0x18] sm:$0xff] %vm300, -inf
          %305 = vst.msk [vmem:[#allocation3] sm:$0xff] %vm300, 0.0
          %306 = vst.msk [vmem:[#allocation3 + $0x8] sm:$0xff] %vm300, 0.0
          %307 = vst.msk [vmem:[#allocation3 + $0x10] sm:$0xff] %vm300, 0.0
          %308 = vst.msk [vmem:[#allocation3 + $0x18] sm:$0xff] %vm300, 0.0
          %vm309 = vcmask 261120
          %310 = vst.msk [vmem:[#allocation4] sm:$0xff] %vm309, 0.0
        $region48: #{tpu_custom_call.1} parent=31 // pred_fallthru
          _
        %s311 = smul.u32 %s29, 8
        %s312 = smul.u32 %s30, 8
        %s313 = sadd.s32 %s311, 7
        %p314 = scmp.le.s32.totalorder %s312, %s313
        // Predicated region
        $region49: #{tpu_custom_call.1} parent=31 // pred_check
          %p315 = pneg %p314
        $region50: #{tpu_custom_call.1} parent=31 // pred_check_branch
          %317 = sbr.rel (%p315) target = $region52
        $region51: #{tpu_custom_call.1} parent=31 // pred_region
          %v318 = vlaneseq
          %v319 = vshrl.u32 %v318, 7
          %v320 = vstv %s311
          %v321 = vadd.s32 %v320, %v319
          %v322 = vlaneseq
          %v323 = vand.u32 %v322, 127
          %v324 = vstv %s312
          %v325 = vadd.s32 %v324, %v323
          %vm326 = vcmp.le.s32.totalorder %v325, %v321
          %v327 = vld [vmem:[%s242] sm:$0xff]
          %v328 = vld [vmem:[%s252] sm:$0xff]
          %v329 = vld [vmem:[%s262] sm:$0xff]
          %vm330 = vcmask 64512
          %v332 = vsel %vm330, %v327, 0
          %v335 = vsel %vm330, %v328, 0
          %337 = vmatpush.xpose.msra.mxu0 0.0
          %338 = vmatpush.xpose.msra.mxu0 0.0
          %339 = vmatpush.xpose.msra.mxu0 0.0
          %340 = vmatpush.xpose.msra.mxu0 0.0
          %341 = vmatpush.xpose.msra.mxu0 0.0
          %342 = vmatpush.xpose.msra.mxu0 0.0
          %343 = vmatpush.xpose.msra.mxu0 0.0
          %344 = vmatpush.xpose.msra.mxu0 0.0
          %345 = vmatpush.xpose.msra.mxu0 0.0
          %346 = vmatpush.xpose.msra.mxu0 0.0
          %347 = vmatpush.xpose.msra.mxu0 0.0
          %348 = vmatpush.xpose.msra.mxu0 0.0
          %349 = vmatpush.xpose.msra.mxu0 0.0
          %350 = vmatpush.xpose.msra.mxu0 0.0
          %351 = vmatpush.xpose.msra.mxu0 0.0
          %352 = vmatpush.xpose.msra.mxu0 %v335
          %353 = vmatmul.f32.gmra.mxu0 %v332
          %v354 = vpop.f32.mrf.mxu0
          %v355 = vadd.f32 0.0, %v354
          %356 = vdwg.mxu0
          %v357 = vmul.f32 %v355, 0.35355338
          %v358 = vsel %vm326, %v357, -1e+30
          %v359 = vld [vmem:[#allocation2] sm:$0xff]
          %v360 = vsel %vm330, %v358, -inf
          %361 = vmax.xlane.f32.xlu0 %v360
          %v362 = vpop.xlane.xlu0 %361
          %v363 = vmax.f32 %v359, %v362
          %v364 = vsub.f32 %v359, %v363
          %v365 = vmul.f32 %v364, 1.442695
          %v366 = vpow.pop %v365
          %368 = vset.pattern.permute.xlu0 0
          %369 = vperm.xlu0 %368, %v363
          %v370 = vpop.permute.xlu0 %369
          %v372 = vsub.f32 %v358, %v370
          %v373 = vmul.f32 %v372, 1.442695
          %v374 = vpow.pop %v373
          %v375 = vld [vmem:[#allocation3] sm:$0xff]
          %v376 = vmul.f32 %v366, %v375
          %v377 = vsel %vm330, %v374, 0.0
          %378 = vadd.xlane.f32.xlu0 %v377
          %v379 = vpop.xlane.xlu0 %378
          %v380 = vadd.f32 %v376, %v379
          %vm381 = vcmask 7168
          %382 = vst.msk [vmem:[#allocation3] sm:$0xff] %vm381, %v380
          %383 = vst.msk [vmem:[#allocation2] sm:$0xff] %vm381, %v363
          %v385 = vsel %vm330, %v374, 0
          %387 = vmatpush.msra.mxu0 0.0
          %388 = vmatpush.msra.mxu0 0.0
          %389 = vmatpush.msra.mxu0 0.0
          %390 = vmatpush.msra.mxu0 0.0
          %391 = vmatpush.msra.mxu0 0.0
          %392 = vmatpush.msra.mxu0 0.0
          %393 = vmatpush.msra.mxu0 0.0
          %394 = vmatpush.msra.mxu0 0.0
          %395 = vmatpush.msra.mxu0 0.0
          %396 = vmatpush.msra.mxu0 0.0
          %397 = vmatpush.msra.mxu0 0.0
          %398 = vmatpush.msra.mxu0 0.0
          %399 = vmatpush.msra.mxu0 0.0
          %400 = vmatpush.msra.mxu0 0.0
          %401 = vmatpush.msra.mxu0 0.0
          %402 = vmatpush.msra.mxu0 %v329
          %403 = vmatmul.f32.gmra.mxu0 %v385
          %v404 = vpop.f32.mrf.mxu0
          %v405 = vadd.f32 0.0, %v404
          %406 = vdwg.mxu0
          %v407 = vld [vmem:[#allocation4] sm:$0xff]
          %409 = vset.pattern.permute.xlu0 0
          %410 = vperm.xlu0 %409, %v366
          %v411 = vpop.permute.xlu0 %410
          %v413 = vmul.f32 %v411, %v407
          %v414 = vadd.f32 %v413, %v405
          %415 = vst.msk [vmem:[#allocation4] sm:$0xff] %vm330, %v414
          %v416 = vld [vmem:[%s242] sm:$0xff]
          %v417 = vld [vmem:[%s252] sm:$0xff]
          %v418 = vld [vmem:[%s262] sm:$0xff]
          %420 = vrot.lane.b32.xlu0 %v416, 120
          %v421 = vpop.permute.xlu0 %420
          %423 = vrot.lane.b32.xlu0 %v417, 120
          %v424 = vpop.permute.xlu0 %423
          %v425 = vsel %vm330, %v421, 0
          %v427 = vsel %vm330, %v424, 0
          %429 = vmatpush.xpose.msra.mxu0 0.0
          %430 = vmatpush.xpose.msra.mxu0 0.0
          %431 = vmatpush.xpose.msra.mxu0 0.0
          %432 = vmatpush.xpose.msra.mxu0 0.0
          %433 = vmatpush.xpose.msra.mxu0 0.0
          %434 = vmatpush.xpose.msra.mxu0 0.0
          %435 = vmatpush.xpose.msra.mxu0 0.0
          %436 = vmatpush.xpose.msra.mxu0 0.0
          %437 = vmatpush.xpose.msra.mxu0 0.0
          %438 = vmatpush.xpose.msra.mxu0 0.0
          %439 = vmatpush.xpose.msra.mxu0 0.0
          %440 = vmatpush.xpose.msra.mxu0 0.0
          %441 = vmatpush.xpose.msra.mxu0 0.0
          %442 = vmatpush.xpose.msra.mxu0 0.0
          %443 = vmatpush.xpose.msra.mxu0 0.0
          %444 = vmatpush.xpose.msra.mxu0 %v427
          %445 = vmatmul.f32.gmra.mxu0 %v425
          %v446 = vpop.f32.mrf.mxu0
          %v447 = vadd.f32 0.0, %v446
          %448 = vdwg.mxu0
          %v449 = vmul.f32 %v447, 0.35355338
          %v450 = vsel %vm326, %v449, -1e+30
          %s451 = scalar_lea.vmem [#allocation2], 8
          %v452 = vld [vmem:[%s451] sm:$0xff]
          %v453 = vsel %vm330, %v450, -inf
          %454 = vmax.xlane.f32.xlu0 %v453
          %v455 = vpop.xlane.xlu0 %454
          %v456 = vmax.f32 %v452, %v455
          %v457 = vsub.f32 %v452, %v456
          %v458 = vmul.f32 %v457, 1.442695
          %v459 = vpow.pop %v458
          %461 = vset.pattern.permute.xlu0 0
          %462 = vperm.xlu0 %461, %v456
          %v463 = vpop.permute.xlu0 %462
          %v465 = vsub.f32 %v450, %v463
          %v466 = vmul.f32 %v465, 1.442695
          %v467 = vpow.pop %v466
          %s468 = scalar_lea.vmem [#allocation3], 8
          %v469 = vld [vmem:[%s468] sm:$0xff]
          %v470 = vmul.f32 %v459, %v469
          %v471 = vsel %vm330, %v467, 0.0
          %472 = vadd.xlane.f32.xlu0 %v471
          %v473 = vpop.xlane.xlu0 %472
          %v474 = vadd.f32 %v470, %v473
          %475 = vst.msk [vmem:[%s468] sm:$0xff] %vm381, %v474
          %476 = vst.msk [vmem:[%s451] sm:$0xff] %vm381, %v456
          %478 = vrot.lane.b32.xlu0 %v418, 120
          %v479 = vpop.permute.xlu0 %478
          %v482 = vsel %vm330, %v467, 0
          %484 = vmatpush.msra.mxu0 0.0
          %485 = vmatpush.msra.mxu0 0.0
          %486 = vmatpush.msra.mxu0 0.0
          %487 = vmatpush.msra.mxu0 0.0
          %488 = vmatpush.msra.mxu0 0.0
          %489 = vmatpush.msra.mxu0 0.0
          %490 = vmatpush.msra.mxu0 0.0
          %491 = vmatpush.msra.mxu0 0.0
          %492 = vmatpush.msra.mxu0 0.0
          %493 = vmatpush.msra.mxu0 0.0
          %494 = vmatpush.msra.mxu0 0.0
          %495 = vmatpush.msra.mxu0 0.0
          %496 = vmatpush.msra.mxu0 0.0
          %497 = vmatpush.msra.mxu0 0.0
          %498 = vmatpush.msra.mxu0 0.0
          %499 = vmatpush.msra.mxu0 %v479
          %500 = vmatmul.f32.gmra.mxu0 %v482
          %v501 = vpop.f32.mrf.mxu0
          %v502 = vadd.f32 0.0, %v501
          %503 = vdwg.mxu0
          %v504 = vld [vmem:[#allocation4] sm:$0xff]
          %506 = vset.pattern.permute.xlu0 0
          %507 = vperm.xlu0 %506, %v459
          %v508 = vpop.permute.xlu0 %507
          %v510 = vmul.f32 %v508, %v504
          %512 = vrot.lane.b32.xlu0 %v502, 8
          %v513 = vpop.permute.xlu0 %512
          %v515 = vadd.f32 %v510, %v513
          %vm516 = vcmask 130112
          %517 = vst.msk [vmem:[#allocation4] sm:$0xff] %vm516, %v515
          %v518 = vld [vmem:[%s242] sm:$0xff]
          %v519 = vld [vmem:[%s252] sm:$0xff]
          %v520 = vld [vmem:[%s262] sm:$0xff]
          %522 = vrot.lane.b32.xlu0 %v518, 112
          %v523 = vpop.permute.xlu0 %522
          %525 = vrot.lane.b32.xlu0 %v519, 112
          %v526 = vpop.permute.xlu0 %525
          %v527 = vsel %vm330, %v523, 0
          %v529 = vsel %vm330, %v526, 0
          %531 = vmatpush.xpose.msra.mxu0 0.0
          %532 = vmatpush.xpose.msra.mxu0 0.0
          %533 = vmatpush.xpose.msra.mxu0 0.0
          %534 = vmatpush.xpose.msra.mxu0 0.0
          %535 = vmatpush.xpose.msra.mxu0 0.0
          %536 = vmatpush.xpose.msra.mxu0 0.0
          %537 = vmatpush.xpose.msra.mxu0 0.0
          %538 = vmatpush.xpose.msra.mxu0 0.0
          %539 = vmatpush.xpose.msra.mxu0 0.0
          %540 = vmatpush.xpose.msra.mxu0 0.0
          %541 = vmatpush.xpose.msra.mxu0 0.0
          %542 = vmatpush.xpose.msra.mxu0 0.0
          %543 = vmatpush.xpose.msra.mxu0 0.0
          %544 = vmatpush.xpose.msra.mxu0 0.0
          %545 = vmatpush.xpose.msra.mxu0 0.0
          %546 = vmatpush.xpose.msra.mxu0 %v529
          %547 = vmatmul.f32.gmra.mxu0 %v527
          %v548 = vpop.f32.mrf.mxu0
          %v549 = vadd.f32 0.0, %v548
          %550 = vdwg.mxu0
          %v551 = vmul.f32 %v549, 0.35355338
          %v552 = vsel %vm326, %v551, -1e+30
          %s553 = scalar_lea.vmem [#allocation2], 16
          %v554 = vld [vmem:[%s553] sm:$0xff]
          %v555 = vsel %vm330, %v552, -inf
          %556 = vmax.xlane.f32.xlu0 %v555
          %v557 = vpop.xlane.xlu0 %556
          %v558 = vmax.f32 %v554, %v557
          %v559 = vsub.f32 %v554, %v558
          %v560 = vmul.f32 %v559, 1.442695
          %v561 = vpow.pop %v560
          %563 = vset.pattern.permute.xlu0 0
          %564 = vperm.xlu0 %563, %v558
          %v565 = vpop.permute.xlu0 %564
          %v567 = vsub.f32 %v552, %v565
          %v568 = vmul.f32 %v567, 1.442695
          %v569 = vpow.pop %v568
          %s570 = scalar_lea.vmem [#allocation3], 16
          %v571 = vld [vmem:[%s570] sm:$0xff]
          %v572 = vmul.f32 %v561, %v571
          %v573 = vsel %vm330, %v569, 0.0
          %574 = vadd.xlane.f32.xlu0 %v573
          %v575 = vpop.xlane.xlu0 %574
          %v576 = vadd.f32 %v572, %v575
          %577 = vst.msk [vmem:[%s570] sm:$0xff] %vm381, %v576
          %578 = vst.msk [vmem:[%s553] sm:$0xff] %vm381, %v558
          %580 = vrot.lane.b32.xlu0 %v520, 112
          %v581 = vpop.permute.xlu0 %580
          %v584 = vsel %vm330, %v569, 0
          %586 = vmatpush.msra.mxu0 0.0
          %587 = vmatpush.msra.mxu0 0.0
          %588 = vmatpush.msra.mxu0 0.0
          %589 = vmatpush.msra.mxu0 0.0
          %590 = vmatpush.msra.mxu0 0.0
          %591 = vmatpush.msra.mxu0 0.0
          %592 = vmatpush.msra.mxu0 0.0
          %593 = vmatpush.msra.mxu0 0.0
          %594 = vmatpush.msra.mxu0 0.0
          %595 = vmatpush.msra.mxu0 0.0
          %596 = vmatpush.msra.mxu0 0.0
          %597 = vmatpush.msra.mxu0 0.0
          %598 = vmatpush.msra.mxu0 0.0
          %599 = vmatpush.msra.mxu0 0.0
          %600 = vmatpush.msra.mxu0 0.0
          %601 = vmatpush.msra.mxu0 %v581
          %602 = vmatmul.f32.gmra.mxu0 %v584
          %v603 = vpop.f32.mrf.mxu0
          %v604 = vadd.f32 0.0, %v603
          %605 = vdwg.mxu0
          %v606 = vld [vmem:[#allocation4] sm:$0xff]
          %608 = vset.pattern.permute.xlu0 0
          %609 = vperm.xlu0 %608, %v561
          %v610 = vpop.permute.xlu0 %609
          %v612 = vmul.f32 %v610, %v606
          %614 = vrot.lane.b32.xlu0 %v604, 16
          %v615 = vpop.permute.xlu0 %614
          %v617 = vadd.f32 %v612, %v615
          %vm618 = vcmask 195712
          %619 = vst.msk [vmem:[#allocation4] sm:$0xff] %vm618, %v617
          %v620 = vld [vmem:[%s242] sm:$0xff]
          %v621 = vld [vmem:[%s252] sm:$0xff]
          %v622 = vld [vmem:[%s262] sm:$0xff]
          %624 = vrot.lane.b32.xlu0 %v620, 104
          %v625 = vpop.permute.xlu0 %624
          %627 = vrot.lane.b32.xlu0 %v621, 104
          %v628 = vpop.permute.xlu0 %627
          %v629 = vsel %vm330, %v625, 0
          %v631 = vsel %vm330, %v628, 0
          %633 = vmatpush.xpose.msra.mxu0 0.0
          %634 = vmatpush.xpose.msra.mxu0 0.0
          %635 = vmatpush.xpose.msra.mxu0 0.0
          %636 = vmatpush.xpose.msra.mxu0 0.0
          %637 = vmatpush.xpose.msra.mxu0 0.0
          %638 = vmatpush.xpose.msra.mxu0 0.0
          %639 = vmatpush.xpose.msra.mxu0 0.0
          %640 = vmatpush.xpose.msra.mxu0 0.0
          %641 = vmatpush.xpose.msra.mxu0 0.0
          %642 = vmatpush.xpose.msra.mxu0 0.0
          %643 = vmatpush.xpose.msra.mxu0 0.0
          %644 = vmatpush.xpose.msra.mxu0 0.0
          %645 = vmatpush.xpose.msra.mxu0 0.0
          %646 = vmatpush.xpose.msra.mxu0 0.0
          %647 = vmatpush.xpose.msra.mxu0 0.0
          %648 = vmatpush.xpose.msra.mxu0 %v631
          %649 = vmatmul.f32.gmra.mxu0 %v629
          %v650 = vpop.f32.mrf.mxu0
          %v651 = vadd.f32 0.0, %v650
          %652 = vdwg.mxu0
          %v653 = vmul.f32 %v651, 0.35355338
          %v654 = vsel %vm326, %v653, -1e+30
          %s655 = scalar_lea.vmem [#allocation2], 24
          %v656 = vld [vmem:[%s655] sm:$0xff]
          %v657 = vsel %vm330, %v654, -inf
          %658 = vmax.xlane.f32.xlu0 %v657
          %v659 = vpop.xlane.xlu0 %658
          %v660 = vmax.f32 %v656, %v659
          %v661 = vsub.f32 %v656, %v660
          %v662 = vmul.f32 %v661, 1.442695
          %v663 = vpow.pop %v662
          %665 = vset.pattern.permute.xlu0 0
          %666 = vperm.xlu0 %665, %v660
          %v667 = vpop.permute.xlu0 %666
          %v669 = vsub.f32 %v654, %v667
          %v670 = vmul.f32 %v669, 1.442695
          %v671 = vpow.pop %v670
          %s672 = scalar_lea.vmem [#allocation3], 24
          %v673 = vld [vmem:[%s672] sm:$0xff]
          %v674 = vmul.f32 %v663, %v673
          %v675 = vsel %vm330, %v671, 0.0
          %676 = vadd.xlane.f32.xlu0 %v675
          %v677 = vpop.xlane.xlu0 %676
          %v678 = vadd.f32 %v674, %v677
          %679 = vst.msk [vmem:[%s672] sm:$0xff] %vm381, %v678
          %680 = vst.msk [vmem:[%s655] sm:$0xff] %vm381, %v660
          %682 = vrot.lane.b32.xlu0 %v622, 104
          %v683 = vpop.permute.xlu0 %682
          %v686 = vsel %vm330, %v671, 0
          %688 = vmatpush.msra.mxu0 0.0
          %689 = vmatpush.msra.mxu0 0.0
          %690 = vmatpush.msra.mxu0 0.0
          %691 = vmatpush.msra.mxu0 0.0
          %692 = vmatpush.msra.mxu0 0.0
          %693 = vmatpush.msra.mxu0 0.0
          %694 = vmatpush.msra.mxu0 0.0
          %695 = vmatpush.msra.mxu0 0.0
          %696 = vmatpush.msra.mxu0 0.0
          %697 = vmatpush.msra.mxu0 0.0
          %698 = vmatpush.msra.mxu0 0.0
          %699 = vmatpush.msra.mxu0 0.0
          %700 = vmatpush.msra.mxu0 0.0
          %701 = vmatpush.msra.mxu0 0.0
          %702 = vmatpush.msra.mxu0 0.0
          %703 = vmatpush.msra.mxu0 %v683
          %704 = vmatmul.f32.gmra.mxu0 %v686
          %v705 = vpop.f32.mrf.mxu0
          %v706 = vadd.f32 0.0, %v705
          %707 = vdwg.mxu0
          %v708 = vld [vmem:[#allocation4] sm:$0xff]
          %710 = vset.pattern.permute.xlu0 0
          %711 = vperm.xlu0 %710, %v663
          %v712 = vpop.permute.xlu0 %711
          %v714 = vmul.f32 %v712, %v708
          %716 = vrot.lane.b32.xlu0 %v706, 24
          %v717 = vpop.permute.xlu0 %716
          %v719 = vadd.f32 %v714, %v717
          %vm720 = vcmask 261312
          %721 = vst.msk [vmem:[#allocation4] sm:$0xff] %vm720, %v719
        $region52: #{tpu_custom_call.1} parent=31 // pred_fallthru
          _
        %p722 = scmp.eq.s32.totalorder %s30, 1
        // Predicated region
        $region53: #{tpu_custom_call.1} parent=31 // pred_check
          %p723 = pneg %p722
        $region54: #{tpu_custom_call.1} parent=31 // pred_check_branch
          %725 = sbr.rel (%p723) target = $region56
        $region55: #{tpu_custom_call.1} parent=31 // pred_region
          %v726 = vld [vmem:[#allocation3] sm:$0xff]
          %v727 = vrcp.pop %v726
          %v728 = vmul.f32 %v726, %v727
          %v729 = vsub.f32 1.0, %v728
          %v730 = vmul.f32 %v727, %v729
          %v731 = vadd.f32 %v727, %v730
          %vm732 = vweird.f32 %v726
          %vm733 = vweird.f32 %v727
          %vm734 = vmor %vm732, %vm733
          %v735 = vsel %vm734, %v727, %v731
          %v736 = vand.u32 2147483647, %v726
          %vm737 = vcmp.eq.f32.partialorder %v736, 8.507059e+37
          %v738 = vand.u32 %v726, 2147483648
          %v739 = vor.u32 1.1754944e-38, %v738
          %v740 = vsel %vm737, %v739, %v735
          %v741 = vld [vmem:[#allocation4] sm:$0xff]
          %743 = vset.pattern.permute.xlu0 0
          %744 = vperm.xlu0 %743, %v740
          %v745 = vpop.permute.xlu0 %744
          %v747 = vmul.f32 %v741, %v745
          %vm748 = vcmask 64512
          %749 = vst.msk [vmem:[#allocation4] sm:$0xff] %vm748, %v747
          %s750 = scalar_lea.vmem [#allocation3], 8
          %v751 = vld [vmem:[%s750] sm:$0xff]
          %v752 = vrcp.pop %v751
          %v753 = vmul.f32 %v751, %v752
          %v754 = vsub.f32 1.0, %v753
          %v755 = vmul.f32 %v752, %v754
          %v756 = vadd.f32 %v752, %v755
          %vm757 = vweird.f32 %v751
          %vm758 = vweird.f32 %v752
          %vm759 = vmor %vm757, %vm758
          %v760 = vsel %vm759, %v752, %v756
          %v761 = vand.u32 2147483647, %v751
          %vm762 = vcmp.eq.f32.partialorder %v761, 8.507059e+37
          %v763 = vand.u32 %v751, 2147483648
          %v764 = vor.u32 1.1754944e-38, %v763
          %v765 = vsel %vm762, %v764, %v760
          %v766 = vld [vmem:[#allocation4] sm:$0xff]
          %768 = vset.pattern.permute.xlu0 0
          %769 = vperm.xlu0 %768, %v765
          %v770 = vpop.permute.xlu0 %769
          %v772 = vmul.f32 %v766, %v770
          %vm773 = vcmask 130112
          %774 = vst.msk [vmem:[#allocation4] sm:$0xff] %vm773, %v772
          %s775 = scalar_lea.vmem [#allocation3], 16
          %v776 = vld [vmem:[%s775] sm:$0xff]
          %v777 = vrcp.pop %v776
          %v778 = vmul.f32 %v776, %v777
          %v779 = vsub.f32 1.0, %v778
          %v780 = vmul.f32 %v777, %v779
          %v781 = vadd.f32 %v777, %v780
          %vm782 = vweird.f32 %v776
          %vm783 = vweird.f32 %v777
          %vm784 = vmor %vm782, %vm783
          %v785 = vsel %vm784, %v777, %v781
          %v786 = vand.u32 2147483647, %v776
          %vm787 = vcmp.eq.f32.partialorder %v786, 8.507059e+37
          %v788 = vand.u32 %v776, 2147483648
          %v789 = vor.u32 1.1754944e-38, %v788
          %v790 = vsel %vm787, %v789, %v785
          %v791 = vld [vmem:[#allocation4] sm:$0xff]
          %793 = vset.pattern.permute.xlu0 0
          %794 = vperm.xlu0 %793, %v790
          %v795 = vpop.permute.xlu0 %794
          %v797 = vmul.f32 %v791, %v795
          %vm798 = vcmask 195712
          %799 = vst.msk [vmem:[#allocation4] sm:$0xff] %vm798, %v797
          %s800 = scalar_lea.vmem [#allocation3], 24
          %v801 = vld [vmem:[%s800] sm:$0xff]
          %v802 = vrcp.pop %v801
          %v803 = vmul.f32 %v801, %v802
          %v804 = vsub.f32 1.0, %v803
          %v805 = vmul.f32 %v802, %v804
          %v806 = vadd.f32 %v802, %v805
          %vm807 = vweird.f32 %v801
          %vm808 = vweird.f32 %v802
          %vm809 = vmor %vm807, %vm808
          %v810 = vsel %vm809, %v802, %v806
          %v811 = vand.u32 2147483647, %v801
          %vm812 = vcmp.eq.f32.partialorder %v811, 8.507059e+37
          %v813 = vand.u32 %v801, 2147483648
          %v814 = vor.u32 1.1754944e-38, %v813
          %v815 = vsel %vm812, %v814, %v810
          %v816 = vld [vmem:[#allocation4] sm:$0xff]
          %818 = vset.pattern.permute.xlu0 0
          %819 = vperm.xlu0 %818, %v815
          %v820 = vpop.permute.xlu0 %819
          %v822 = vmul.f32 %v816, %v820
          %vm823 = vcmask 261312
          %824 = vst.msk [vmem:[#allocation4] sm:$0xff] %vm823, %v822
          %v825 = vld [vmem:[#allocation4] sm:$0xff]
          %vm826 = vcmask 261120
          %827 = vst.msk [vmem:[%s295] sm:$0xff] %vm826, %v825
        $region56: #{tpu_custom_call.1} parent=31 // pred_fallthru
          _
        %s828 = sand.u32 %s136, 1
        %s829 = scalar_lea.sflag [#allocation7], %s828
        %s830 = sand.u32 %s136, 1
        %s831 = smul.addr %s830, 8
        %s832 = scalar_lea.vmem [#allocation11], %s831
        // Predicated region
        $region57: #{tpu_custom_call.1} parent=31 // pred_check
          %p833 = pneg %p146
        $region58: #{tpu_custom_call.1} parent=31 // pred_check_branch
          %835 = sbr.rel (%p833) target = $region60
        $region59: #{tpu_custom_call.1} parent=31 // pred_region
          %837 = vsyncadd %s829, 0
          %s838 = smul.addr %s28, 2
          %s839 = sadd.s32 %s29, %s838
          %s840 = smul.addr %s839, 8
          %s841 = scalar_lea.hbm %s3, %s840
          %s843 = sshll.u32 %s832, 4
          %s844 = int_to_ptr.vmem [resolvable:$true] %s843
          %s845 = sshll.u32 %s841, 4
          %s846 = int_to_ptr.hbm [resolvable:$true] %s845
          %848 = dma.vmem_to_hbm [thread:$0]  %s844, 128, %s846, %s829
        $region60: #{tpu_custom_call.1} parent=31 // pred_fallthru
          _
      $region32: #{tpu_custom_call.1} parent=5 // pred_fallthru
        _
      %p849 = scmp.le.s32.totalorder 2, %s18
      // Predicated region
      $region61: #{tpu_custom_call.1} parent=5 // pred_check
        %p850 = pneg %p849
      $region62: #{tpu_custom_call.1} parent=5 // pred_check_branch
        %852 = sbr.rel (%p850) target = $region64
      $region63: #{tpu_custom_call.1} parent=5 // pred_region
        %s853 = ssub.s32 %s18, 2
        // Predicated region
        $region65: #{tpu_custom_call.1} parent=63 // pred_check
          %p854 = pneg %p152
        $region66: #{tpu_custom_call.1} parent=63 // pred_check_branch
          %856 = sbr.rel (%p854) target = $region68
        $region67: #{tpu_custom_call.1} parent=63 // pred_region
          %s857 = sand.u32 %s137, 1
          %s858 = scalar_lea.sflag [#allocation7], %s857
          %s859 = sand.u32 %s137, 1
          %s860 = smul.addr %s859, 8
          %s861 = scalar_lea.vmem [#allocation11], %s860
          %863 = dma.done %s858, 128
        $region68: #{tpu_custom_call.1} parent=63 // pred_fallthru
          _
      $region64: #{tpu_custom_call.1} parent=5 // pred_fallthru
        _
    $region6: #{tpu_custom_call.1} parent=1 // loop_footer
      %s22 = sadd.s32 1, %s18
    $region7: #{tpu_custom_call.1} parent=1 // loop_footer_branch
      %17 = sbr.rel target = $region3
    $region8: #{tpu_custom_call.1} parent=1 // loop_exit
      _
    %864 = vsyncpa [#allocation6], 1
    %s865 = scalar_lea.sflag [#allocation6], 1
    %866 = vsyncpa %s865, 1
    %867 = vsyncpa [#allocation9], 1
    %s868 = scalar_lea.sflag [#allocation9], 1
    %869 = vsyncpa %s868, 1
    %870 = vsyncpa [#allocation7], 1
    %s871 = scalar_lea.sflag [#allocation7], 1
    %872 = vsyncpa %s871, 1

</llo_original>
